<compile_context>
chip_gen: v7x
topology: tpu7x:2x2x1
jax: 0.10.0
libtpu: 0.0.40
codegen_flags: <defaults>
</compile_context>

<pallas_src>
import jax
import jax.numpy as jnp
from jax.experimental import pallas as pl
from jax.experimental.pallas import tpu as pltpu


def lstm_fc_kernel(emb_ref, lens_ref, wih_t_ref, whh_t_ref, b_ref,
                   wfc_t_ref, bfc_ref,
                   logits_ref, outseq_ref,
                   gx_scr):
    """Shapes (Bp = batch padded to multiple of 8, G = 4*H = 128 = lane-dense gate width):
       emb_ref:    [T*Bp, E]  bf16   embedded tokens, time-major, flattened
       lens_ref:   [Bp, G]    int32  sequence lengths, pre-broadcast across lanes
       wih_t_ref:  [E, G]     bf16   W_ih^T
       whh_t_ref:  [G, G]     f32    W_hh^T zero-padded (rows H..G-1 are zero)
       b_ref:      [1, G]     f32    b_ih + b_hh
       wfc_t_ref:  [G, O]     f32    W_fc^T zero-padded (rows H..G-1 are zero)
       bfc_ref:    [1, O]     f32
       logits_ref: [Bp, O]    f32
       outseq_ref: [T, Bp, G] f32    per-step hidden; lanes [0,H) are the real output
       gx_scr:     [T*Bp, G]  f32    hoisted input projection
    """
    T, Bp, G = outseq_ref.shape
    H = G // 4

    # (1) Hoisted input projection: one big MXU matmul (bf16 inputs, f32 accumulate),
    #     instead of T tiny matmuls sitting on the serial critical path.
    gx_scr[...] = (
        jnp.dot(emb_ref[...], wih_t_ref[...], preferred_element_type=jnp.float32)
        + b_ref[...])

    # (5) Loop-invariant values hoisted out of the recurrence (JAX does not CSE broadcasts).
    lens = lens_ref[...]                                   # [Bp, G] int32
    whh_t = whh_t_ref[...]                                 # [G, G]  f32
    lane = jax.lax.broadcasted_iota(jnp.int32, (Bp, G), 1)
    g_lanes = (lane >= 2 * H) & (lane < 3 * H)             # cell-candidate (tanh) lane block
    zeros = jnp.zeros((Bp, G), jnp.float32)

    # h/c live in vregs as [Bp, G]: lanes [0,H) hold the real state, lanes [H,G) carry
    # bounded junk that is ignored (the padded weight rows >= H are zero).
    h = zeros
    c = zeros

    # (4) Fully unrolled at trace time (T is a static Python int), so the VLIW scheduler can
    #     overlap MXU pushes / EUP transcendentals / output stores of adjacent timesteps.
    for t in range(T):
        x_gates = gx_scr[t * Bp:(t + 1) * Bp, :]           # [Bp, G] f32
        gates = x_gates + jnp.dot(h, whh_t, preferred_element_type=jnp.float32)

        # (3) Full-vreg nonlinearities + lane-mask blend; PyTorch gate order i|f|g|o lives in
        #     lane blocks 0..3.  pltpu.roll (XLU) aligns each gate with lanes [0,H).
        act = jnp.where(g_lanes, jnp.tanh(gates), jax.nn.sigmoid(gates))
        i_g = act                                          # input gate  @ lanes [0,H)
        f_g = pltpu.roll(act, shift=3 * H, axis=1)         # forget gate -> lanes [0,H)
        g_g = pltpu.roll(act, shift=2 * H, axis=1)         # cell cand.  -> lanes [0,H)
        o_g = pltpu.roll(act, shift=1 * H, axis=1)         # output gate -> lanes [0,H)

        c_new = f_g * c + i_g * g_g
        h_new = o_g * jnp.tanh(c_new)

        # pack_padded_sequence semantics: rows past their length keep (h, c) and emit zeros.
        valid = lens > t
        h = jnp.where(valid, h_new, h)
        c = jnp.where(valid, c_new, c)
        # (2) Lane-dense, unmasked [8,128] store; the wrapper slices [:, :, :H].
        outseq_ref[t] = jnp.where(valid, h_new, zeros)

    # fc(hidden): final (length-masked) hidden through the linear head (dropout == identity).
    logits_ref[...] = (
        jnp.dot(h, wfc_t_ref[...], preferred_element_type=jnp.float32) + bfc_ref[...])


def rnn_forward(text, text_lengths, params):
    """text: [T, B] int32 token ids (seq-major, nn.LSTM default); text_lengths: [B]."""
    T, B = text.shape
    emb_table = params["embedding"]                 # [V, E]
    E = emb_table.shape[1]
    G = params["w_ih"].shape[0]                     # 4H
    H = G // 4
    O = params["w_fc"].shape[0]
    Bp = ((B + 7) // 8) * 8                         # (6) pad batch to a full sublane tile

    # Glue in plain JAX: embedding gather + dropout (identity, p=0.0).
    # TODO(synk): train-mode dropout mask.
    embedded = emb_table[text]                      # [T, B, E]
    embedded = jnp.pad(embedded, ((0, 0), (0, Bp - B), (0, 0)))
    emb2d = embedded.reshape(T * Bp, E).astype(jnp.bfloat16)   # (7) bf16 MXU feed

    wih_t = params["w_ih"].T.astype(jnp.bfloat16)   # [E, 4H]
    bias = (params["b_ih"] + params["b_hh"]).reshape(1, G).astype(jnp.float32)
    # (3) Zero-pad the contraction dim of the recurrent / fc weights so the kernel can feed
    #     the full [Bp, 4H] state vreg to the MXU without any lane slicing.
    whh_t = jnp.zeros((G, G), jnp.float32).at[:H, :].set(params["w_hh"].T.astype(jnp.float32))
    wfc_t = jnp.zeros((G, O), jnp.float32).at[:H, :].set(params["w_fc"].T.astype(jnp.float32))
    bfc = params["b_fc"].reshape(1, O).astype(jnp.float32)

    lens = jnp.pad(text_lengths.astype(jnp.int32), (0, Bp - B))
    lens_b = jnp.broadcast_to(lens[:, None], (Bp, G))          # (5) hoisted length broadcast

    vmem = pl.BlockSpec(memory_space=pltpu.MemorySpace.VMEM)
    logits, outseq = pl.pallas_call(
        lstm_fc_kernel,
        out_shape=(jax.ShapeDtypeStruct((Bp, O), jnp.float32),
                   jax.ShapeDtypeStruct((T, Bp, G), jnp.float32)),
        in_specs=[vmem] * 7,
        out_specs=(vmem, vmem),
        scratch_shapes=[pltpu.VMEM((T * Bp, G), jnp.float32)],
        # TODO(synk): at production T/B/H, add a grid over T-chunks ("arbitrary") with h/c in
        # scratch so emb/outseq stream through VMEM (v7x: 64 MiB), split B across TensorCores,
        # and move the embedding gather in-kernel via PrefetchScalarGridSpec.
    )(emb2d, lens_b, wih_t, whh_t, bias, wfc_t, bfc)

    # pad_packed_sequence(..., batch_first=True) -> [B, T, H]; drop batch/lane padding.
    output = jnp.transpose(outseq[:, :B, :H], (1, 0, 2))
    return logits[:B], output, text_lengths


def rnn_reference(text, text_lengths, params):
    """Pure-JAX reference (same bf16 input projection) for numerical validation."""
    emb_table = params["embedding"]
    H = params["w_hh"].shape[1]
    T, B = text.shape
    x = emb_table[text]                                        # [T, B, E]
    gx = (jnp.dot(x.astype(jnp.bfloat16), params["w_ih"].T.astype(jnp.bfloat16),
                  preferred_element_type=jnp.float32)
          + (params["b_ih"] + params["b_hh"]))                 # [T, B, 4H]
    whh_t = params["w_hh"].T
    h = jnp.zeros((B, H), jnp.float32)
    c = jnp.zeros((B, H), jnp.float32)
    outs = []
    for t in range(T):
        gates = gx[t] + jnp.dot(h, whh_t)
        i_g = jax.nn.sigmoid(gates[:, 0 * H:1 * H])
        f_g = jax.nn.sigmoid(gates[:, 1 * H:2 * H])
        g_g = jnp.tanh(gates[:, 2 * H:3 * H])
        o_g = jax.nn.sigmoid(gates[:, 3 * H:4 * H])
        c_new = f_g * c + i_g * g_g
        h_new = o_g * jnp.tanh(c_new)
        valid = (text_lengths > t)[:, None]
        h = jnp.where(valid, h_new, h)
        c = jnp.where(valid, c_new, c)
        outs.append(jnp.where(valid, h_new, 0.0))
    output = jnp.stack(outs, axis=1)                           # [B, T, H]
    logits = jnp.dot(h, params["w_fc"].T) + params["b_fc"]
    return logits, output


def init_params(key, vocab_size, embedding_dim, hidden_dim, output_dim, pad_idx):
    ks = jax.random.split(key, 7)
    H, E, V, O = hidden_dim, embedding_dim, vocab_size, output_dim
    s = 1.0 / jnp.sqrt(H)
    emb = jax.random.normal(ks[0], (V, E), jnp.float32)
    emb = emb.at[pad_idx].set(0.0)                 # padding_idx row is zero
    return {
        "embedding": emb,
        "w_ih": jax.random.uniform(ks[1], (4 * H, E), jnp.float32, -s, s),
        "w_hh": jax.random.uniform(ks[2], (4 * H, H), jnp.float32, -s, s),
        "b_ih": jax.random.uniform(ks[3], (4 * H,), jnp.float32, -s, s),
        "b_hh": jax.random.uniform(ks[4], (4 * H,), jnp.float32, -s, s),
        "w_fc": jax.random.uniform(ks[5], (O, H), jnp.float32, -s, s),
        "b_fc": jax.random.uniform(ks[6], (O,), jnp.float32, -s, s),
    }


if __name__ == "__main__":
    # Module hyperparams: vocab_size=50, embedding_dim=32, hidden_dim=32, output_dim=4,
    # n_layers=1, bidirectional=False, dropout=0.0, pad_idx=0, rnn_type='lstm'
    V, E, H, O, PAD = 50, 32, 32, 4, 0
    T, B = 8, 4

    key = jax.random.PRNGKey(0)
    k_par, k_txt = jax.random.split(key)
    params = init_params(k_par, V, E, H, O, PAD)

    text_lengths = jnp.array([8, 6, 3, 1], dtype=jnp.int32)    # max == T
    text = jax.random.randint(k_txt, (T, B), 1, V, dtype=jnp.int32)
    t_idx = jnp.arange(T)[:, None]
    text = jnp.where(t_idx < text_lengths[None, :], text, PAD)  # zero pad positions

    logits, output, output_lengths = jax.jit(rnn_forward)(text, text_lengths, params)
    jax.block_until_ready((logits, output, output_lengths))

    assert logits.shape == (B, O)
    assert output.shape == (B, T, H)
    assert output_lengths.shape == (B,)

    # Numerical check against a pure-JAX reference (tolerance covers MXU precision modes).
    ref_logits, ref_output = rnn_reference(text, text_lengths, params)
    assert float(jnp.max(jnp.abs(logits - ref_logits))) < 2e-2
    assert float(jnp.max(jnp.abs(output - ref_output))) < 2e-2

    print("KERNEL_OK")
</pallas_src>

<mosaic_0001>
module attributes {stable_mosaic.version = 11 : i64} {
  func.func @lstm_fc_kernel(%arg0: memref<64x32xbf16, #tpu.memory_space<vmem>>, %arg1: memref<8x128xi32, #tpu.memory_space<vmem>>, %arg2: memref<32x128xbf16, #tpu.memory_space<vmem>>, %arg3: memref<128x128xf32, #tpu.memory_space<vmem>>, %arg4: memref<1x128xf32, #tpu.memory_space<vmem>>, %arg5: memref<128x4xf32, #tpu.memory_space<vmem>>, %arg6: memref<1x4xf32, #tpu.memory_space<vmem>>, %arg7: memref<8x4xf32, #tpu.memory_space<vmem>>, %arg8: memref<8x8x128xf32, #tpu.memory_space<vmem>>, %arg9: memref<64x128xf32, #tpu.memory_space<vmem>>) attributes {dimension_semantics = [], scalar_prefetch = 0 : i64, scratch_operands = 1 : i64, tpu.core_type = #tpu.core_type<tc>} {
    %c0 = arith.constant 0 : index
    %c0_0 = arith.constant 0 : index
    %0 = vector.load %arg0[%c0, %c0_0] : memref<64x32xbf16, #tpu.memory_space<vmem>>, vector<64x32xbf16>
    %c0_1 = arith.constant 0 : index
    %c0_2 = arith.constant 0 : index
    %1 = vector.load %arg2[%c0_1, %c0_2] : memref<32x128xbf16, #tpu.memory_space<vmem>>, vector<32x128xbf16>
    %cst = arith.constant dense<0.000000e+00> : vector<64x128xf32>
    %2 = tpu.matmul %0, %1, %cst {dimension_numbers = #tpu.dot_dimension_numbers<[1], [0], [0], [1], [0, 0, 1, 1], [], []>} : vector<64x32xbf16>, vector<32x128xbf16>, vector<64x128xf32> -> vector<64x128xf32>
    %c0_3 = arith.constant 0 : index
    %c0_4 = arith.constant 0 : index
    %3 = vector.load %arg4[%c0_3, %c0_4] : memref<1x128xf32, #tpu.memory_space<vmem>>, vector<1x128xf32>
    %4 = vector.broadcast %3 : vector<1x128xf32> to vector<64x128xf32>
    %5 = arith.addf %2, %4 : vector<64x128xf32>
    %c0_5 = arith.constant 0 : index
    %c0_6 = arith.constant 0 : index
    %6 = vector.load %arg9[%c0_5, %c0_6] : memref<64x128xf32, #tpu.memory_space<vmem>>, vector<64x128xf32>
    tpu.vector_store %arg9[%c0_5, %c0_6], %5 {strides = array<i32>} : memref<64x128xf32, #tpu.memory_space<vmem>>, vector<64x128xf32>,
    %c0_7 = arith.constant 0 : index
    %c0_8 = arith.constant 0 : index
    %7 = vector.load %arg1[%c0_7, %c0_8] : memref<8x128xi32, #tpu.memory_space<vmem>>, vector<8x128xi32>
    %c0_9 = arith.constant 0 : index
    %c0_10 = arith.constant 0 : index
    %8 = vector.load %arg3[%c0_9, %c0_10] : memref<128x128xf32, #tpu.memory_space<vmem>>, vector<128x128xf32>
    %9 = tpu.iota {dimensions = array<i32: 1>} : vector<8x128xi32>
    %c64_i32 = arith.constant 64 : i32
    %10 = vector.broadcast %c64_i32 : i32 to vector<8x128xi32>
    %11 = arith.cmpi sge, %9, %10 : vector<8x128xi32>
    %c96_i32 = arith.constant 96 : i32
    %12 = vector.broadcast %c96_i32 : i32 to vector<8x128xi32>
    %13 = arith.cmpi slt, %9, %12 : vector<8x128xi32>
    %14 = arith.andi %11, %13 : vector<8x128xi1>
    %cst_11 = arith.constant 0.000000e+00 : f32
    %15 = vector.broadcast %cst_11 : f32 to vector<8x128xf32>
    %c0_12 = arith.constant 0 : index
    %c0_13 = arith.constant 0 : index
    %16 = vector.load %arg9[%c0_12, %c0_13] : memref<64x128xf32, #tpu.memory_space<vmem>>, vector<8x128xf32>
    %cst_14 = arith.constant dense<0.000000e+00> : vector<8x128xf32>
    %17 = tpu.matmul %15, %8, %cst_14 {dimension_numbers = #tpu.dot_dimension_numbers<[1], [0], [0], [1], [0, 0, 1, 1], [], []>} : vector<8x128xf32>, vector<128x128xf32>, vector<8x128xf32> -> vector<8x128xf32>
    %18 = arith.addf %16, %17 : vector<8x128xf32>
    %19 = math.tanh %18 : vector<8x128xf32>
    %20 = arith.negf %18 : vector<8x128xf32>
    %21 = math.exp %20 : vector<8x128xf32>
    %cst_15 = arith.constant 1.000000e+00 : f32
    %22 = vector.broadcast %cst_15 : f32 to vector<8x128xf32>
    %23 = arith.addf %22, %21 : vector<8x128xf32>
    %24 = arith.divf %22, %23 : vector<8x128xf32>
    %25 = arith.select %14, %19, %24 : vector<8x128xi1>, vector<8x128xf32>
    %c96_i32_16 = arith.constant 96 : i32
    %26 = tpu.dynamic_rotate %25 by %c96_i32_16 dim 1 : vector<8x128xf32>, i32 -> vector<8x128xf32>
    %c64_i32_17 = arith.constant 64 : i32
    %27 = tpu.dynamic_rotate %25 by %c64_i32_17 dim 1 : vector<8x128xf32>, i32 -> vector<8x128xf32>
    %c32_i32 = arith.constant 32 : i32
    %28 = tpu.dynamic_rotate %25 by %c32_i32 dim 1 : vector<8x128xf32>, i32 -> vector<8x128xf32>
    %29 = arith.mulf %26, %15 : vector<8x128xf32>
    %30 = arith.mulf %25, %27 : vector<8x128xf32>
    %31 = arith.addf %29, %30 : vector<8x128xf32>
    %32 = math.tanh %31 : vector<8x128xf32>
    %33 = arith.mulf %28, %32 : vector<8x128xf32>
    %c0_i32 = arith.constant 0 : i32
    %34 = vector.broadcast %c0_i32 : i32 to vector<8x128xi32>
    %35 = arith.cmpi sgt, %7, %34 : vector<8x128xi32>
    %36 = arith.select %35, %33, %15 : vector<8x128xi1>, vector<8x128xf32>
    %37 = arith.select %35, %31, %15 : vector<8x128xi1>, vector<8x128xf32>
    %38 = arith.select %35, %33, %15 : vector<8x128xi1>, vector<8x128xf32>
    %c0_18 = arith.constant 0 : index
    %c0_19 = arith.constant 0 : index
    %c0_20 = arith.constant 0 : index
    %39 = vector.load %arg8[%c0_18, %c0_19, %c0_20] : memref<8x8x128xf32, #tpu.memory_space<vmem>>, vector<1x8x128xf32>
    %40 = vector.shape_cast %39 : vector<1x8x128xf32> to vector<8x128xf32>
    %41 = vector.shape_cast %38 : vector<8x128xf32> to vector<1x8x128xf32>
    tpu.vector_store %arg8[%c0_18, %c0_19, %c0_20], %41 {strides = array<i32>} : memref<8x8x128xf32, #tpu.memory_space<vmem>>, vector<1x8x128xf32>,
    %c8 = arith.constant 8 : index
    %c0_21 = arith.constant 0 : index
    %42 = vector.load %arg9[%c8, %c0_21] : memref<64x128xf32, #tpu.memory_space<vmem>>, vector<8x128xf32>
    %cst_22 = arith.constant dense<0.000000e+00> : vector<8x128xf32>
    %43 = tpu.matmul %36, %8, %cst_22 {dimension_numbers = #tpu.dot_dimension_numbers<[1], [0], [0], [1], [0, 0, 1, 1], [], []>} : vector<8x128xf32>, vector<128x128xf32>, vector<8x128xf32> -> vector<8x128xf32>
    %44 = arith.addf %42, %43 : vector<8x128xf32>
    %45 = math.tanh %44 : vector<8x128xf32>
    %46 = arith.negf %44 : vector<8x128xf32>
    %47 = math.exp %46 : vector<8x128xf32>
    %cst_23 = arith.constant 1.000000e+00 : f32
    %48 = vector.broadcast %cst_23 : f32 to vector<8x128xf32>
    %49 = arith.addf %48, %47 : vector<8x128xf32>
    %50 = arith.divf %48, %49 : vector<8x128xf32>
    %51 = arith.select %14, %45, %50 : vector<8x128xi1>, vector<8x128xf32>
    %c96_i32_24 = arith.constant 96 : i32
    %52 = tpu.dynamic_rotate %51 by %c96_i32_24 dim 1 : vector<8x128xf32>, i32 -> vector<8x128xf32>
    %c64_i32_25 = arith.constant 64 : i32
    %53 = tpu.dynamic_rotate %51 by %c64_i32_25 dim 1 : vector<8x128xf32>, i32 -> vector<8x128xf32>
    %c32_i32_26 = arith.constant 32 : i32
    %54 = tpu.dynamic_rotate %51 by %c32_i32_26 dim 1 : vector<8x128xf32>, i32 -> vector<8x128xf32>
    %55 = arith.mulf %52, %37 : vector<8x128xf32>
    %56 = arith.mulf %51, %53 : vector<8x128xf32>
    %57 = arith.addf %55, %56 : vector<8x128xf32>
    %58 = math.tanh %57 : vector<8x128xf32>
    %59 = arith.mulf %54, %58 : vector<8x128xf32>
    %c1_i32 = arith.constant 1 : i32
    %60 = vector.broadcast %c1_i32 : i32 to vector<8x128xi32>
    %61 = arith.cmpi sgt, %7, %60 : vector<8x128xi32>
    %62 = arith.select %61, %59, %36 : vector<8x128xi1>, vector<8x128xf32>
    %63 = arith.select %61, %57, %37 : vector<8x128xi1>, vector<8x128xf32>
    %64 = arith.select %61, %59, %15 : vector<8x128xi1>, vector<8x128xf32>
    %c1 = arith.constant 1 : index
    %c0_27 = arith.constant 0 : index
    %c0_28 = arith.constant 0 : index
    %65 = vector.load %arg8[%c1, %c0_27, %c0_28] : memref<8x8x128xf32, #tpu.memory_space<vmem>>, vector<1x8x128xf32>
    %66 = vector.shape_cast %65 : vector<1x8x128xf32> to vector<8x128xf32>
    %67 = vector.shape_cast %64 : vector<8x128xf32> to vector<1x8x128xf32>
    tpu.vector_store %arg8[%c1, %c0_27, %c0_28], %67 {strides = array<i32>} : memref<8x8x128xf32, #tpu.memory_space<vmem>>, vector<1x8x128xf32>,
    %c16 = arith.constant 16 : index
    %c0_29 = arith.constant 0 : index
    %68 = vector.load %arg9[%c16, %c0_29] : memref<64x128xf32, #tpu.memory_space<vmem>>, vector<8x128xf32>
    %cst_30 = arith.constant dense<0.000000e+00> : vector<8x128xf32>
    %69 = tpu.matmul %62, %8, %cst_30 {dimension_numbers = #tpu.dot_dimension_numbers<[1], [0], [0], [1], [0, 0, 1, 1], [], []>} : vector<8x128xf32>, vector<128x128xf32>, vector<8x128xf32> -> vector<8x128xf32>
    %70 = arith.addf %68, %69 : vector<8x128xf32>
    %71 = math.tanh %70 : vector<8x128xf32>
    %72 = arith.negf %70 : vector<8x128xf32>
    %73 = math.exp %72 : vector<8x128xf32>
    %cst_31 = arith.constant 1.000000e+00 : f32
    %74 = vector.broadcast %cst_31 : f32 to vector<8x128xf32>
    %75 = arith.addf %74, %73 : vector<8x128xf32>
    %76 = arith.divf %74, %75 : vector<8x128xf32>
    %77 = arith.select %14, %71, %76 : vector<8x128xi1>, vector<8x128xf32>
    %c96_i32_32 = arith.constant 96 : i32
    %78 = tpu.dynamic_rotate %77 by %c96_i32_32 dim 1 : vector<8x128xf32>, i32 -> vector<8x128xf32>
    %c64_i32_33 = arith.constant 64 : i32
    %79 = tpu.dynamic_rotate %77 by %c64_i32_33 dim 1 : vector<8x128xf32>, i32 -> vector<8x128xf32>
    %c32_i32_34 = arith.constant 32 : i32
    %80 = tpu.dynamic_rotate %77 by %c32_i32_34 dim 1 : vector<8x128xf32>, i32 -> vector<8x128xf32>
    %81 = arith.mulf %78, %63 : vector<8x128xf32>
    %82 = arith.mulf %77, %79 : vector<8x128xf32>
    %83 = arith.addf %81, %82 : vector<8x128xf32>
    %84 = math.tanh %83 : vector<8x128xf32>
    %85 = arith.mulf %80, %84 : vector<8x128xf32>
    %c2_i32 = arith.constant 2 : i32
    %86 = vector.broadcast %c2_i32 : i32 to vector<8x128xi32>
    %87 = arith.cmpi sgt, %7, %86 : vector<8x128xi32>
    %88 = arith.select %87, %85, %62 : vector<8x128xi1>, vector<8x128xf32>
    %89 = arith.select %87, %83, %63 : vector<8x128xi1>, vector<8x128xf32>
    %90 = arith.select %87, %85, %15 : vector<8x128xi1>, vector<8x128xf32>
    %c2 = arith.constant 2 : index
    %c0_35 = arith.constant 0 : index
    %c0_36 = arith.constant 0 : index
    %91 = vector.load %arg8[%c2, %c0_35, %c0_36] : memref<8x8x128xf32, #tpu.memory_space<vmem>>, vector<1x8x128xf32>
    %92 = vector.shape_cast %91 : vector<1x8x128xf32> to vector<8x128xf32>
    %93 = vector.shape_cast %90 : vector<8x128xf32> to vector<1x8x128xf32>
    tpu.vector_store %arg8[%c2, %c0_35, %c0_36], %93 {strides = array<i32>} : memref<8x8x128xf32, #tpu.memory_space<vmem>>, vector<1x8x128xf32>,
    %c24 = arith.constant 24 : index
    %c0_37 = arith.constant 0 : index
    %94 = vector.load %arg9[%c24, %c0_37] : memref<64x128xf32, #tpu.memory_space<vmem>>, vector<8x128xf32>
    %cst_38 = arith.constant dense<0.000000e+00> : vector<8x128xf32>
    %95 = tpu.matmul %88, %8, %cst_38 {dimension_numbers = #tpu.dot_dimension_numbers<[1], [0], [0], [1], [0, 0, 1, 1], [], []>} : vector<8x128xf32>, vector<128x128xf32>, vector<8x128xf32> -> vector<8x128xf32>
    %96 = arith.addf %94, %95 : vector<8x128xf32>
    %97 = math.tanh %96 : vector<8x128xf32>
    %98 = arith.negf %96 : vector<8x128xf32>
    %99 = math.exp %98 : vector<8x128xf32>
    %cst_39 = arith.constant 1.000000e+00 : f32
    %100 = vector.broadcast %cst_39 : f32 to vector<8x128xf32>
    %101 = arith.addf %100, %99 : vector<8x128xf32>
    %102 = arith.divf %100, %101 : vector<8x128xf32>
    %103 = arith.select %14, %97, %102 : vector<8x128xi1>, vector<8x128xf32>
    %c96_i32_40 = arith.constant 96 : i32
    %104 = tpu.dynamic_rotate %103 by %c96_i32_40 dim 1 : vector<8x128xf32>, i32 -> vector<8x128xf32>
    %c64_i32_41 = arith.constant 64 : i32
    %105 = tpu.dynamic_rotate %103 by %c64_i32_41 dim 1 : vector<8x128xf32>, i32 -> vector<8x128xf32>
    %c32_i32_42 = arith.constant 32 : i32
    %106 = tpu.dynamic_rotate %103 by %c32_i32_42 dim 1 : vector<8x128xf32>, i32 -> vector<8x128xf32>
    %107 = arith.mulf %104, %89 : vector<8x128xf32>
    %108 = arith.mulf %103, %105 : vector<8x128xf32>
    %109 = arith.addf %107, %108 : vector<8x128xf32>
    %110 = math.tanh %109 : vector<8x128xf32>
    %111 = arith.mulf %106, %110 : vector<8x128xf32>
    %c3_i32 = arith.constant 3 : i32
    %112 = vector.broadcast %c3_i32 : i32 to vector<8x128xi32>
    %113 = arith.cmpi sgt, %7, %112 : vector<8x128xi32>
    %114 = arith.select %113, %111, %88 : vector<8x128xi1>, vector<8x128xf32>
    %115 = arith.select %113, %109, %89 : vector<8x128xi1>, vector<8x128xf32>
    %116 = arith.select %113, %111, %15 : vector<8x128xi1>, vector<8x128xf32>
    %c3 = arith.constant 3 : index
    %c0_43 = arith.constant 0 : index
    %c0_44 = arith.constant 0 : index
    %117 = vector.load %arg8[%c3, %c0_43, %c0_44] : memref<8x8x128xf32, #tpu.memory_space<vmem>>, vector<1x8x128xf32>
    %118 = vector.shape_cast %117 : vector<1x8x128xf32> to vector<8x128xf32>
    %119 = vector.shape_cast %116 : vector<8x128xf32> to vector<1x8x128xf32>
    tpu.vector_store %arg8[%c3, %c0_43, %c0_44], %119 {strides = array<i32>} : memref<8x8x128xf32, #tpu.memory_space<vmem>>, vector<1x8x128xf32>,
    %c32 = arith.constant 32 : index
    %c0_45 = arith.constant 0 : index
    %120 = vector.load %arg9[%c32, %c0_45] : memref<64x128xf32, #tpu.memory_space<vmem>>, vector<8x128xf32>
    %cst_46 = arith.constant dense<0.000000e+00> : vector<8x128xf32>
    %121 = tpu.matmul %114, %8, %cst_46 {dimension_numbers = #tpu.dot_dimension_numbers<[1], [0], [0], [1], [0, 0, 1, 1], [], []>} : vector<8x128xf32>, vector<128x128xf32>, vector<8x128xf32> -> vector<8x128xf32>
    %122 = arith.addf %120, %121 : vector<8x128xf32>
    %123 = math.tanh %122 : vector<8x128xf32>
    %124 = arith.negf %122 : vector<8x128xf32>
    %125 = math.exp %124 : vector<8x128xf32>
    %cst_47 = arith.constant 1.000000e+00 : f32
    %126 = vector.broadcast %cst_47 : f32 to vector<8x128xf32>
    %127 = arith.addf %126, %125 : vector<8x128xf32>
    %128 = arith.divf %126, %127 : vector<8x128xf32>
    %129 = arith.select %14, %123, %128 : vector<8x128xi1>, vector<8x128xf32>
    %c96_i32_48 = arith.constant 96 : i32
    %130 = tpu.dynamic_rotate %129 by %c96_i32_48 dim 1 : vector<8x128xf32>, i32 -> vector<8x128xf32>
    %c64_i32_49 = arith.constant 64 : i32
    %131 = tpu.dynamic_rotate %129 by %c64_i32_49 dim 1 : vector<8x128xf32>, i32 -> vector<8x128xf32>
    %c32_i32_50 = arith.constant 32 : i32
    %132 = tpu.dynamic_rotate %129 by %c32_i32_50 dim 1 : vector<8x128xf32>, i32 -> vector<8x128xf32>
    %133 = arith.mulf %130, %115 : vector<8x128xf32>
    %134 = arith.mulf %129, %131 : vector<8x128xf32>
    %135 = arith.addf %133, %134 : vector<8x128xf32>
    %136 = math.tanh %135 : vector<8x128xf32>
    %137 = arith.mulf %132, %136 : vector<8x128xf32>
    %c4_i32 = arith.constant 4 : i32
    %138 = vector.broadcast %c4_i32 : i32 to vector<8x128xi32>
    %139 = arith.cmpi sgt, %7, %138 : vector<8x128xi32>
    %140 = arith.select %139, %137, %114 : vector<8x128xi1>, vector<8x128xf32>
    %141 = arith.select %139, %135, %115 : vector<8x128xi1>, vector<8x128xf32>
    %142 = arith.select %139, %137, %15 : vector<8x128xi1>, vector<8x128xf32>
    %c4 = arith.constant 4 : index
    %c0_51 = arith.constant 0 : index
    %c0_52 = arith.constant 0 : index
    %143 = vector.load %arg8[%c4, %c0_51, %c0_52] : memref<8x8x128xf32, #tpu.memory_space<vmem>>, vector<1x8x128xf32>
    %144 = vector.shape_cast %143 : vector<1x8x128xf32> to vector<8x128xf32>
    %145 = vector.shape_cast %142 : vector<8x128xf32> to vector<1x8x128xf32>
    tpu.vector_store %arg8[%c4, %c0_51, %c0_52], %145 {strides = array<i32>} : memref<8x8x128xf32, #tpu.memory_space<vmem>>, vector<1x8x128xf32>,
    %c40 = arith.constant 40 : index
    %c0_53 = arith.constant 0 : index
    %146 = vector.load %arg9[%c40, %c0_53] : memref<64x128xf32, #tpu.memory_space<vmem>>, vector<8x128xf32>
    %cst_54 = arith.constant dense<0.000000e+00> : vector<8x128xf32>
    %147 = tpu.matmul %140, %8, %cst_54 {dimension_numbers = #tpu.dot_dimension_numbers<[1], [0], [0], [1], [0, 0, 1, 1], [], []>} : vector<8x128xf32>, vector<128x128xf32>, vector<8x128xf32> -> vector<8x128xf32>
    %148 = arith.addf %146, %147 : vector<8x128xf32>
    %149 = math.tanh %148 : vector<8x128xf32>
    %150 = arith.negf %148 : vector<8x128xf32>
    %151 = math.exp %150 : vector<8x128xf32>
    %cst_55 = arith.constant 1.000000e+00 : f32
    %152 = vector.broadcast %cst_55 : f32 to vector<8x128xf32>
    %153 = arith.addf %152, %151 : vector<8x128xf32>
    %154 = arith.divf %152, %153 : vector<8x128xf32>
    %155 = arith.select %14, %149, %154 : vector<8x128xi1>, vector<8x128xf32>
    %c96_i32_56 = arith.constant 96 : i32
    %156 = tpu.dynamic_rotate %155 by %c96_i32_56 dim 1 : vector<8x128xf32>, i32 -> vector<8x128xf32>
    %c64_i32_57 = arith.constant 64 : i32
    %157 = tpu.dynamic_rotate %155 by %c64_i32_57 dim 1 : vector<8x128xf32>, i32 -> vector<8x128xf32>
    %c32_i32_58 = arith.constant 32 : i32
    %158 = tpu.dynamic_rotate %155 by %c32_i32_58 dim 1 : vector<8x128xf32>, i32 -> vector<8x128xf32>
    %159 = arith.mulf %156, %141 : vector<8x128xf32>
    %160 = arith.mulf %155, %157 : vector<8x128xf32>
    %161 = arith.addf %159, %160 : vector<8x128xf32>
    %162 = math.tanh %161 : vector<8x128xf32>
    %163 = arith.mulf %158, %162 : vector<8x128xf32>
    %c5_i32 = arith.constant 5 : i32
    %164 = vector.broadcast %c5_i32 : i32 to vector<8x128xi32>
    %165 = arith.cmpi sgt, %7, %164 : vector<8x128xi32>
    %166 = arith.select %165, %163, %140 : vector<8x128xi1>, vector<8x128xf32>
    %167 = arith.select %165, %161, %141 : vector<8x128xi1>, vector<8x128xf32>
    %168 = arith.select %165, %163, %15 : vector<8x128xi1>, vector<8x128xf32>
    %c5 = arith.constant 5 : index
    %c0_59 = arith.constant 0 : index
    %c0_60 = arith.constant 0 : index
    %169 = vector.load %arg8[%c5, %c0_59, %c0_60] : memref<8x8x128xf32, #tpu.memory_space<vmem>>, vector<1x8x128xf32>
    %170 = vector.shape_cast %169 : vector<1x8x128xf32> to vector<8x128xf32>
    %171 = vector.shape_cast %168 : vector<8x128xf32> to vector<1x8x128xf32>
    tpu.vector_store %arg8[%c5, %c0_59, %c0_60], %171 {strides = array<i32>} : memref<8x8x128xf32, #tpu.memory_space<vmem>>, vector<1x8x128xf32>,
    %c48 = arith.constant 48 : index
    %c0_61 = arith.constant 0 : index
    %172 = vector.load %arg9[%c48, %c0_61] : memref<64x128xf32, #tpu.memory_space<vmem>>, vector<8x128xf32>
    %cst_62 = arith.constant dense<0.000000e+00> : vector<8x128xf32>
    %173 = tpu.matmul %166, %8, %cst_62 {dimension_numbers = #tpu.dot_dimension_numbers<[1], [0], [0], [1], [0, 0, 1, 1], [], []>} : vector<8x128xf32>, vector<128x128xf32>, vector<8x128xf32> -> vector<8x128xf32>
    %174 = arith.addf %172, %173 : vector<8x128xf32>
    %175 = math.tanh %174 : vector<8x128xf32>
    %176 = arith.negf %174 : vector<8x128xf32>
    %177 = math.exp %176 : vector<8x128xf32>
    %cst_63 = arith.constant 1.000000e+00 : f32
    %178 = vector.broadcast %cst_63 : f32 to vector<8x128xf32>
    %179 = arith.addf %178, %177 : vector<8x128xf32>
    %180 = arith.divf %178, %179 : vector<8x128xf32>
    %181 = arith.select %14, %175, %180 : vector<8x128xi1>, vector<8x128xf32>
    %c96_i32_64 = arith.constant 96 : i32
    %182 = tpu.dynamic_rotate %181 by %c96_i32_64 dim 1 : vector<8x128xf32>, i32 -> vector<8x128xf32>
    %c64_i32_65 = arith.constant 64 : i32
    %183 = tpu.dynamic_rotate %181 by %c64_i32_65 dim 1 : vector<8x128xf32>, i32 -> vector<8x128xf32>
    %c32_i32_66 = arith.constant 32 : i32
    %184 = tpu.dynamic_rotate %181 by %c32_i32_66 dim 1 : vector<8x128xf32>, i32 -> vector<8x128xf32>
    %185 = arith.mulf %182, %167 : vector<8x128xf32>
    %186 = arith.mulf %181, %183 : vector<8x128xf32>
    %187 = arith.addf %185, %186 : vector<8x128xf32>
    %188 = math.tanh %187 : vector<8x128xf32>
    %189 = arith.mulf %184, %188 : vector<8x128xf32>
    %c6_i32 = arith.constant 6 : i32
    %190 = vector.broadcast %c6_i32 : i32 to vector<8x128xi32>
    %191 = arith.cmpi sgt, %7, %190 : vector<8x128xi32>
    %192 = arith.select %191, %189, %166 : vector<8x128xi1>, vector<8x128xf32>
    %193 = arith.select %191, %187, %167 : vector<8x128xi1>, vector<8x128xf32>
    %194 = arith.select %191, %189, %15 : vector<8x128xi1>, vector<8x128xf32>
    %c6 = arith.constant 6 : index
    %c0_67 = arith.constant 0 : index
    %c0_68 = arith.constant 0 : index
    %195 = vector.load %arg8[%c6, %c0_67, %c0_68] : memref<8x8x128xf32, #tpu.memory_space<vmem>>, vector<1x8x128xf32>
    %196 = vector.shape_cast %195 : vector<1x8x128xf32> to vector<8x128xf32>
    %197 = vector.shape_cast %194 : vector<8x128xf32> to vector<1x8x128xf32>
    tpu.vector_store %arg8[%c6, %c0_67, %c0_68], %197 {strides = array<i32>} : memref<8x8x128xf32, #tpu.memory_space<vmem>>, vector<1x8x128xf32>,
    %c56 = arith.constant 56 : index
    %c0_69 = arith.constant 0 : index
    %198 = vector.load %arg9[%c56, %c0_69] : memref<64x128xf32, #tpu.memory_space<vmem>>, vector<8x128xf32>
    %cst_70 = arith.constant dense<0.000000e+00> : vector<8x128xf32>
    %199 = tpu.matmul %192, %8, %cst_70 {dimension_numbers = #tpu.dot_dimension_numbers<[1], [0], [0], [1], [0, 0, 1, 1], [], []>} : vector<8x128xf32>, vector<128x128xf32>, vector<8x128xf32> -> vector<8x128xf32>
    %200 = arith.addf %198, %199 : vector<8x128xf32>
    %201 = math.tanh %200 : vector<8x128xf32>
    %202 = arith.negf %200 : vector<8x128xf32>
    %203 = math.exp %202 : vector<8x128xf32>
    %cst_71 = arith.constant 1.000000e+00 : f32
    %204 = vector.broadcast %cst_71 : f32 to vector<8x128xf32>
    %205 = arith.addf %204, %203 : vector<8x128xf32>
    %206 = arith.divf %204, %205 : vector<8x128xf32>
    %207 = arith.select %14, %201, %206 : vector<8x128xi1>, vector<8x128xf32>
    %c96_i32_72 = arith.constant 96 : i32
    %208 = tpu.dynamic_rotate %207 by %c96_i32_72 dim 1 : vector<8x128xf32>, i32 -> vector<8x128xf32>
    %c64_i32_73 = arith.constant 64 : i32
    %209 = tpu.dynamic_rotate %207 by %c64_i32_73 dim 1 : vector<8x128xf32>, i32 -> vector<8x128xf32>
    %c32_i32_74 = arith.constant 32 : i32
    %210 = tpu.dynamic_rotate %207 by %c32_i32_74 dim 1 : vector<8x128xf32>, i32 -> vector<8x128xf32>
    %211 = arith.mulf %208, %193 : vector<8x128xf32>
    %212 = arith.mulf %207, %209 : vector<8x128xf32>
    %213 = arith.addf %211, %212 : vector<8x128xf32>
    %214 = math.tanh %213 : vector<8x128xf32>
    %215 = arith.mulf %210, %214 : vector<8x128xf32>
    %c7_i32 = arith.constant 7 : i32
    %216 = vector.broadcast %c7_i32 : i32 to vector<8x128xi32>
    %217 = arith.cmpi sgt, %7, %216 : vector<8x128xi32>
    %218 = arith.select %217, %215, %192 : vector<8x128xi1>, vector<8x128xf32>
    %219 = arith.select %217, %215, %15 : vector<8x128xi1>, vector<8x128xf32>
    %c7 = arith.constant 7 : index
    %c0_75 = arith.constant 0 : index
    %c0_76 = arith.constant 0 : index
    %220 = vector.load %arg8[%c7, %c0_75, %c0_76] : memref<8x8x128xf32, #tpu.memory_space<vmem>>, vector<1x8x128xf32>
    %221 = vector.shape_cast %220 : vector<1x8x128xf32> to vector<8x128xf32>
    %222 = vector.shape_cast %219 : vector<8x128xf32> to vector<1x8x128xf32>
    tpu.vector_store %arg8[%c7, %c0_75, %c0_76], %222 {strides = array<i32>} : memref<8x8x128xf32, #tpu.memory_space<vmem>>, vector<1x8x128xf32>,
    %c0_77 = arith.constant 0 : index
    %c0_78 = arith.constant 0 : index
    %223 = vector.load %arg5[%c0_77, %c0_78] : memref<128x4xf32, #tpu.memory_space<vmem>>, vector<128x4xf32>
    %cst_79 = arith.constant dense<0.000000e+00> : vector<8x4xf32>
    %224 = tpu.matmul %218, %223, %cst_79 {dimension_numbers = #tpu.dot_dimension_numbers<[1], [0], [0], [1], [0, 0, 1, 1], [], []>} : vector<8x128xf32>, vector<128x4xf32>, vector<8x4xf32> -> vector<8x4xf32>
    %c0_80 = arith.constant 0 : index
    %c0_81 = arith.constant 0 : index
    %225 = vector.load %arg6[%c0_80, %c0_81] : memref<1x4xf32, #tpu.memory_space<vmem>>, vector<1x4xf32>
    %226 = vector.broadcast %225 : vector<1x4xf32> to vector<8x4xf32>
    %227 = arith.addf %224, %226 : vector<8x4xf32>
    %c0_82 = arith.constant 0 : index
    %c0_83 = arith.constant 0 : index
    %228 = vector.load %arg7[%c0_82, %c0_83] : memref<8x4xf32, #tpu.memory_space<vmem>>, vector<8x4xf32>
    tpu.vector_store %arg7[%c0_82, %c0_83], %227 {strides = array<i32>} : memref<8x4xf32, #tpu.memory_space<vmem>>, vector<8x4xf32>,
    return
  }
}

</mosaic_0001>

<llo_original>
// kernel: rnn_forward.1
$region0: #{rnn_forward.1}
  #allocation0 [shape = 'u32[]', space=smem, size = 0x4, offset = 0x4, fixed_abs, tag = 'smem constant byte address 0x4 - core index']
  #allocation1 [shape = 'u32[144,128]{1,0:T(1,128)}', space=vmem, size = 0x12000, scoped, tag = 'internal scratch']
  #allocation2 [shape = 'f32[64,128]{1,0:T(8,128)}', space=vmem, size = 0x8000, scoped, tag = 'scratch operand']
  %s0 = inlined_call_operand.vmem [shape: bf16[64,32], index: 0, kind: input, shape index: {}]
  %s1 = inlined_call_operand.vmem [shape: s32[8,128], index: 1, kind: input, shape index: {}]
  %s2 = inlined_call_operand.vmem [shape: bf16[32,128], index: 2, kind: input, shape index: {}]
  %s3 = inlined_call_operand.vmem [shape: f32[128,128], index: 3, kind: input, shape index: {}]
  %s4 = inlined_call_operand.vmem [shape: f32[1,128], index: 4, kind: input, shape index: {}]
  %s5 = inlined_call_operand.vmem [shape: f32[128,4], index: 5, kind: input, shape index: {}]
  %s6 = inlined_call_operand.vmem [shape: f32[1,4], index: 6, kind: input, shape index: {}]
  %s7 = inlined_call_operand.vmem [shape: f32[8,4], index: 7, kind: output, shape index: {0}]
  %s8 = inlined_call_operand.vmem [shape: f32[8,8,128], index: 8, kind: output, shape index: {1}]
  %9 = xla_tuple %s7, %s8
  %s10 = sld [smem:[#allocation0]]
  $region46: #{rnn_forward.1} parent=0
    _
  %s12 = ssub.s32 1, %s10
  %s13 = scalar_select 0, %s12, %s10
  // Predicated region
  $region2: #{rnn_forward.1} parent=0 // pred_check
    _
  $region3: #{rnn_forward.1} parent=0 // pred_check_branch
    %15 = sbr.rel (0) target = $region5
  $region4: #{rnn_forward.1} parent=0 // pred_region
    _
  $region5: #{rnn_forward.1} parent=0 // pred_fallthru
    _
  // Predicated region
  $region6: #{rnn_forward.1} parent=0 // pred_check
    _
  $region7: #{rnn_forward.1} parent=0 // pred_check_branch
    %17 = sbr.rel (0) target = $region9
  $region8: #{rnn_forward.1} parent=0 // pred_region
    _
  $region9: #{rnn_forward.1} parent=0 // pred_fallthru
    _
  // Predicated region
  $region10: #{rnn_forward.1} parent=0 // pred_check
    _
  $region11: #{rnn_forward.1} parent=0 // pred_check_branch
    %19 = sbr.rel (0) target = $region13
  $region12: #{rnn_forward.1} parent=0 // pred_region
    _
  $region13: #{rnn_forward.1} parent=0 // pred_fallthru
    _
  // Predicated region
  $region14: #{rnn_forward.1} parent=0 // pred_check
    _
  $region15: #{rnn_forward.1} parent=0 // pred_check_branch
    %21 = sbr.rel (0) target = $region17
  $region16: #{rnn_forward.1} parent=0 // pred_region
    _
  $region17: #{rnn_forward.1} parent=0 // pred_fallthru
    _
  // Predicated region
  $region18: #{rnn_forward.1} parent=0 // pred_check
    _
  $region19: #{rnn_forward.1} parent=0 // pred_check_branch
    %23 = sbr.rel (0) target = $region21
  $region20: #{rnn_forward.1} parent=0 // pred_region
    _
  $region21: #{rnn_forward.1} parent=0 // pred_fallthru
    _
  // Predicated region
  $region22: #{rnn_forward.1} parent=0 // pred_check
    _
  $region23: #{rnn_forward.1} parent=0 // pred_check_branch
    %25 = sbr.rel (0) target = $region25
  $region24: #{rnn_forward.1} parent=0 // pred_region
    _
  $region25: #{rnn_forward.1} parent=0 // pred_fallthru
    _
  // Predicated region
  $region26: #{rnn_forward.1} parent=0 // pred_check
    _
  $region27: #{rnn_forward.1} parent=0 // pred_check_branch
    %27 = sbr.rel (0) target = $region29
  $region28: #{rnn_forward.1} parent=0 // pred_region
    _
  $region29: #{rnn_forward.1} parent=0 // pred_fallthru
    _
  %v29 = vld [vmem:[%s0] sm:$0xf]
  %v30 = vld [vmem:[%s0 + $0x4] sm:$0xf]
  %v31 = vld [vmem:[%s0 + $0x8] sm:$0xf]
  %v32 = vld [vmem:[%s0 + $0xc] sm:$0xf]
  %v33 = vld [vmem:[%s0 + $0x10] sm:$0xf]
  %v34 = vld [vmem:[%s0 + $0x14] sm:$0xf]
  %v35 = vld [vmem:[%s0 + $0x18] sm:$0xf]
  %v36 = vld [vmem:[%s0 + $0x1c] sm:$0xf]
  %v37 = vld [vmem:[%s2] sm:$0xf]
  %v38 = vld [vmem:[%s2 + $0x4] sm:$0xf]
  %v39 = vld [vmem:[%s2 + $0x8] sm:$0xf]
  %v40 = vld [vmem:[%s2 + $0xc] sm:$0xf]
  %v41 = vld [vmem:[%s4] sm:$0x1]
  %v43 = vlaneseq
  %v44 = vshrl.u32 %v43, 7
  %v45 = vsub.s32 0, %v44
  %v46 = vrot.slane %v41, %v45
  %v56 = vunpack.c.l.b16 %v29
  %v57 = vunpack.c.l.b16 %v30
  %v58 = vunpack.c.l.b16 %v31
  %v59 = vunpack.c.l.b16 %v32
  %v60 = vunpack.c.l.b16 %v33
  %v61 = vunpack.c.l.b16 %v34
  %v62 = vunpack.c.l.b16 %v35
  %v63 = vunpack.c.l.b16 %v36
  %v64 = vpack.c.b16 %v57, %v56
  %v65 = vpack.c.b16 %v59, %v58
  %v66 = vpack.c.b16 %v61, %v60
  %v67 = vpack.c.b16 %v63, %v62
  %v72 = vunpack.c.l.b16 %v37
  %v73 = vunpack.c.l.b16 %v38
  %v74 = vunpack.c.l.b16 %v39
  %v75 = vunpack.c.l.b16 %v40
  %v76 = vpack.c.b16 %v73, %v72
  %v77 = vpack.c.b16 %v75, %v74
  %vm80 = vcmask 261120
  %v82 = vsel %vm80, %v64, 0
  %v85 = vsel %vm80, %v65, 0
  %v88 = vsel %vm80, %v66, 0
  %v91 = vsel %vm80, %v67, 0
  %93 = vmatprep.subr.bf16.mxu0 0
  %94 = vmatpush1.bf16.msra.mxu0 %v76
  %95 = vmatprep.subr.bf16.mxu0 0
  %96 = vmatpush1.bf16.msra.mxu0 %v77
  %97 = vmatprep.subr.bf16.mxu0 0
  %98 = vmatpush1.bf16.msra.mxu0 0
  %99 = vmatprep.subr.bf16.mxu0 0
  %100 = vmatpush1.bf16.msra.mxu0 0
  %101 = vmatprep.subr.bf16.mxu0 0
  %102 = vmatpush1.bf16.msra.mxu0 0
  %103 = vmatprep.subr.bf16.mxu0 0
  %104 = vmatpush1.bf16.msra.mxu0 0
  %105 = vmatprep.subr.bf16.mxu0 0
  %106 = vmatpush1.bf16.msra.mxu0 0
  %107 = vmatprep.subr.bf16.mxu0 0
  %108 = vmatpush1.bf16.msra.mxu0 0
  %109 = vmatprep.subr.bf16.mxu0 0
  %110 = vmatpush1.bf16.msra.mxu0 0
  %111 = vmatprep.subr.bf16.mxu0 0
  %112 = vmatpush1.bf16.msra.mxu0 0
  %113 = vmatprep.subr.bf16.mxu0 0
  %114 = vmatpush1.bf16.msra.mxu0 0
  %115 = vmatprep.subr.bf16.mxu0 0
  %116 = vmatpush1.bf16.msra.mxu0 0
  %117 = vmatprep.subr.bf16.mxu0 0
  %118 = vmatpush1.bf16.msra.mxu0 0
  %119 = vmatprep.subr.bf16.mxu0 0
  %120 = vmatpush1.bf16.msra.mxu0 0
  %121 = vmatprep.subr.bf16.mxu0 0
  %122 = vmatpush1.bf16.msra.mxu0 0
  %123 = vmatprep.subr.bf16.mxu0 0
  %124 = vmatpush1.bf16.msra.mxu0 0
  %125 = vmatprep.mubr.bf16.mxu0 0
  %126 = vmatmul.mubr.bf16.gmra.mrb[0].mxu0 %v82
  %v127 = vpop.f32.mrb[0].mxu0
  %v128 = vadd.f32 %v46, %v127
  %v129 = vpop.f32.mrb[0].mxu0
  %v130 = vpop.f32.mrb[0].mxu0
  %v131 = vadd.f32 %v46, %v130
  %v132 = vpop.f32.mrb[0].mxu0
  %133 = vmatprep.mubr.bf16.mxu0 0
  %134 = vmatmul.mubr.bf16.gmra.mrb[0].mxu0 %v85
  %v135 = vpop.f32.mrb[0].mxu0
  %v136 = vadd.f32 %v46, %v135
  %v137 = vpop.f32.mrb[0].mxu0
  %v138 = vpop.f32.mrb[0].mxu0
  %v139 = vadd.f32 %v46, %v138
  %v140 = vpop.f32.mrb[0].mxu0
  %141 = vmatprep.mubr.bf16.mxu0 0
  %142 = vmatmul.mubr.bf16.gmra.mrb[0].mxu0 %v88
  %v143 = vpop.f32.mrb[0].mxu0
  %v144 = vadd.f32 %v46, %v143
  %v145 = vpop.f32.mrb[0].mxu0
  %v146 = vpop.f32.mrb[0].mxu0
  %v147 = vadd.f32 %v46, %v146
  %v148 = vpop.f32.mrb[0].mxu0
  %149 = vmatprep.mubr.bf16.mxu0 0
  %150 = vmatmul.mubr.bf16.gmra.mrb[0].mxu0 %v91
  %v151 = vpop.f32.mrb[0].mxu0
  %v152 = vadd.f32 %v46, %v151
  %v153 = vpop.f32.mrb[0].mxu0
  %v154 = vpop.f32.mrb[0].mxu0
  %v155 = vadd.f32 %v46, %v154
  %v156 = vpop.f32.mrb[0].mxu0
  %157 = vdwg.mxu0
  %158 = vst [vmem:[#allocation2] sm:$0xff] %v128
  %159 = vst [vmem:[#allocation2 + $0x8] sm:$0xff] %v131
  %160 = vst [vmem:[#allocation2 + $0x10] sm:$0xff] %v136
  %161 = vst [vmem:[#allocation2 + $0x18] sm:$0xff] %v139
  %162 = vst [vmem:[#allocation2 + $0x20] sm:$0xff] %v144
  %163 = vst [vmem:[#allocation2 + $0x28] sm:$0xff] %v147
  %164 = vst [vmem:[#allocation2 + $0x30] sm:$0xff] %v152
  %165 = vst [vmem:[#allocation2 + $0x38] sm:$0xff] %v155
  %v166 = vld [vmem:[%s1] sm:$0xff]
  %v167 = vld [vmem:[%s3] sm:$0xff]
  %v168 = vld [vmem:[%s3 + $0x8] sm:$0xff]
  %v169 = vld [vmem:[%s3 + $0x10] sm:$0xff]
  %v170 = vld [vmem:[%s3 + $0x18] sm:$0xff]
  %v171 = vld [vmem:[%s3 + $0x20] sm:$0xff]
  %v172 = vld [vmem:[%s3 + $0x28] sm:$0xff]
  %v173 = vld [vmem:[%s3 + $0x30] sm:$0xff]
  %v174 = vld [vmem:[%s3 + $0x38] sm:$0xff]
  %v175 = vld [vmem:[%s3 + $0x40] sm:$0xff]
  %v176 = vld [vmem:[%s3 + $0x48] sm:$0xff]
  %v177 = vld [vmem:[%s3 + $0x50] sm:$0xff]
  %v178 = vld [vmem:[%s3 + $0x58] sm:$0xff]
  %v179 = vld [vmem:[%s3 + $0x60] sm:$0xff]
  %v180 = vld [vmem:[%s3 + $0x68] sm:$0xff]
  %v181 = vld [vmem:[%s3 + $0x70] sm:$0xff]
  %v182 = vld [vmem:[%s3 + $0x78] sm:$0xff]
  %v183 = vlaneseq
  %v184 = vand.u32 %v183, 127
  %vm185 = vcmp.ge.s32.totalorder %v184, 64
  %vm186 = vcmp.lt.s32.totalorder %v184, 96
  %vm187 = vmand %vm185, %vm186
  %v188 = vld [vmem:[#allocation2] sm:$0xff]
  %189 = vmatprep.subr.mxu0 0.0
  %190 = vmatpush1.msra.mxu0 %v167
  %191 = vmatprep.subr.mxu0 0.0
  %192 = vmatpush1.msra.mxu0 %v168
  %193 = vmatprep.subr.mxu0 0.0
  %194 = vmatpush1.msra.mxu0 %v169
  %195 = vmatprep.subr.mxu0 0.0
  %196 = vmatpush1.msra.mxu0 %v170
  %197 = vmatprep.subr.mxu0 0.0
  %198 = vmatpush1.msra.mxu0 %v171
  %199 = vmatprep.subr.mxu0 0.0
  %200 = vmatpush1.msra.mxu0 %v172
  %201 = vmatprep.subr.mxu0 0.0
  %202 = vmatpush1.msra.mxu0 %v173
  %203 = vmatprep.subr.mxu0 0.0
  %204 = vmatpush1.msra.mxu0 %v174
  %205 = vmatprep.subr.mxu0 0.0
  %206 = vmatpush1.msra.mxu0 %v175
  %207 = vmatprep.subr.mxu0 0.0
  %208 = vmatpush1.msra.mxu0 %v176
  %209 = vmatprep.subr.mxu0 0.0
  %210 = vmatpush1.msra.mxu0 %v177
  %211 = vmatprep.subr.mxu0 0.0
  %212 = vmatpush1.msra.mxu0 %v178
  %213 = vmatprep.subr.mxu0 0.0
  %214 = vmatpush1.msra.mxu0 %v179
  %215 = vmatprep.subr.mxu0 0.0
  %216 = vmatpush1.msra.mxu0 %v180
  %217 = vmatprep.subr.mxu0 0.0
  %218 = vmatpush1.msra.mxu0 %v181
  %219 = vmatprep.subr.mxu0 0.0
  %220 = vmatpush1.msra.mxu0 %v182
  %221 = vmatprep.subr.mxu0 0.0
  %222 = vmatpush1.msra.mxu0 0.0
  %223 = vmatprep.subr.mxu0 0.0
  %224 = vmatpush1.msra.mxu0 0.0
  %225 = vmatprep.subr.mxu0 0.0
  %226 = vmatpush1.msra.mxu0 0.0
  %227 = vmatprep.subr.mxu0 0.0
  %228 = vmatpush1.msra.mxu0 0.0
  %229 = vmatprep.subr.mxu0 0.0
  %230 = vmatpush1.msra.mxu0 0.0
  %231 = vmatprep.subr.mxu0 0.0
  %232 = vmatpush1.msra.mxu0 0.0
  %233 = vmatprep.subr.mxu0 0.0
  %234 = vmatpush1.msra.mxu0 0.0
  %235 = vmatprep.subr.mxu0 0.0
  %236 = vmatpush1.msra.mxu0 0.0
  %237 = vmatprep.subr.mxu0 0.0
  %238 = vmatpush1.msra.mxu0 0.0
  %239 = vmatprep.subr.mxu0 0.0
  %240 = vmatpush1.msra.mxu0 0.0
  %241 = vmatprep.subr.mxu0 0.0
  %242 = vmatpush1.msra.mxu0 0.0
  %243 = vmatprep.subr.mxu0 0.0
  %244 = vmatpush1.msra.mxu0 0.0
  %245 = vmatprep.subr.mxu0 0.0
  %246 = vmatpush1.msra.mxu0 0.0
  %247 = vmatprep.subr.mxu0 0.0
  %248 = vmatpush1.msra.mxu0 0.0
  %249 = vmatprep.subr.mxu0 0.0
  %250 = vmatpush1.msra.mxu0 0.0
  %251 = vmatprep.subr.mxu0 0.0
  %252 = vmatpush1.msra.mxu0 0.0
  %253 = vmatprep.mubr.f32.mxu0 0.0
  %254 = vmatmul.mubr.f32.gmra.mrb[0].mxu0 0.0
  %v255 = vpop.f32.mrb[0].mxu0
  %v256 = vadd.f32 0.0, %v255
  %v257 = vpop.f32.mrb[0].mxu0
  %258 = vdwg.mxu0
  %v259 = vadd.f32 %v188, %v256
  %v260 = vtanh.pop %v259
  %v261 = vxor.u32 %v259, 2147483648
  %v262 = vmul.f32 %v261, 1.442695
  %v263 = vpow.pop %v262
  %v264 = vadd.f32 %v263, 1.0
  %v265 = vrcp.pop %v264
  %v266 = vmul.f32 1.0, %v265
  %v267 = vsel %vm187, %v260, %v266
  %268 = vrot.lane.b32.xlu0 %v267, 96
  %v269 = vpop.permute.xlu0 %268
  %270 = vrot.lane.b32.xlu0 %v267, 64
  %v271 = vpop.permute.xlu0 %270
  %272 = vrot.lane.b32.xlu0 %v267, 32
  %v273 = vpop.permute.xlu0 %272
  %v274 = vmul.f32 %v269, 0.0
  %v275 = vmul.f32 %v267, %v271
  %v276 = vadd.f32 %v274, %v275
  %v277 = vtanh.pop %v276
  %v278 = vmul.f32 %v273, %v277
  %vm279 = vcmp.gt.s32.totalorder %v166, 0
  %v280 = vsel %vm279, %v278, 0.0
  %v281 = vsel %vm279, %v276, 0.0
  %282 = vst [vmem:[%s8] sm:$0xff] %v280
  %v283 = vld [vmem:[#allocation2 + $0x8] sm:$0xff]
  %284 = vmatprep.subr.mxu0 0.0
  %285 = vmatpush1.msra.mxu0 %v167
  %286 = vmatprep.subr.mxu0 0.0
  %287 = vmatpush1.msra.mxu0 %v168
  %288 = vmatprep.subr.mxu0 0.0
  %289 = vmatpush1.msra.mxu0 %v169
  %290 = vmatprep.subr.mxu0 0.0
  %291 = vmatpush1.msra.mxu0 %v170
  %292 = vmatprep.subr.mxu0 0.0
  %293 = vmatpush1.msra.mxu0 %v171
  %294 = vmatprep.subr.mxu0 0.0
  %295 = vmatpush1.msra.mxu0 %v172
  %296 = vmatprep.subr.mxu0 0.0
  %297 = vmatpush1.msra.mxu0 %v173
  %298 = vmatprep.subr.mxu0 0.0
  %299 = vmatpush1.msra.mxu0 %v174
  %300 = vmatprep.subr.mxu0 0.0
  %301 = vmatpush1.msra.mxu0 %v175
  %302 = vmatprep.subr.mxu0 0.0
  %303 = vmatpush1.msra.mxu0 %v176
  %304 = vmatprep.subr.mxu0 0.0
  %305 = vmatpush1.msra.mxu0 %v177
  %306 = vmatprep.subr.mxu0 0.0
  %307 = vmatpush1.msra.mxu0 %v178
  %308 = vmatprep.subr.mxu0 0.0
  %309 = vmatpush1.msra.mxu0 %v179
  %310 = vmatprep.subr.mxu0 0.0
  %311 = vmatpush1.msra.mxu0 %v180
  %312 = vmatprep.subr.mxu0 0.0
  %313 = vmatpush1.msra.mxu0 %v181
  %314 = vmatprep.subr.mxu0 0.0
  %315 = vmatpush1.msra.mxu0 %v182
  %316 = vmatprep.subr.mxu0 0.0
  %317 = vmatpush1.msra.mxu0 0.0
  %318 = vmatprep.subr.mxu0 0.0
  %319 = vmatpush1.msra.mxu0 0.0
  %320 = vmatprep.subr.mxu0 0.0
  %321 = vmatpush1.msra.mxu0 0.0
  %322 = vmatprep.subr.mxu0 0.0
  %323 = vmatpush1.msra.mxu0 0.0
  %324 = vmatprep.subr.mxu0 0.0
  %325 = vmatpush1.msra.mxu0 0.0
  %326 = vmatprep.subr.mxu0 0.0
  %327 = vmatpush1.msra.mxu0 0.0
  %328 = vmatprep.subr.mxu0 0.0
  %329 = vmatpush1.msra.mxu0 0.0
  %330 = vmatprep.subr.mxu0 0.0
  %331 = vmatpush1.msra.mxu0 0.0
  %332 = vmatprep.subr.mxu0 0.0
  %333 = vmatpush1.msra.mxu0 0.0
  %334 = vmatprep.subr.mxu0 0.0
  %335 = vmatpush1.msra.mxu0 0.0
  %336 = vmatprep.subr.mxu0 0.0
  %337 = vmatpush1.msra.mxu0 0.0
  %338 = vmatprep.subr.mxu0 0.0
  %339 = vmatpush1.msra.mxu0 0.0
  %340 = vmatprep.subr.mxu0 0.0
  %341 = vmatpush1.msra.mxu0 0.0
  %342 = vmatprep.subr.mxu0 0.0
  %343 = vmatpush1.msra.mxu0 0.0
  %344 = vmatprep.subr.mxu0 0.0
  %345 = vmatpush1.msra.mxu0 0.0
  %346 = vmatprep.subr.mxu0 0.0
  %347 = vmatpush1.msra.mxu0 0.0
  %348 = vmatprep.mubr.f32.mxu0 0.0
  %349 = vmatmul.mubr.f32.gmra.mrb[0].mxu0 %v280
  %v350 = vpop.f32.mrb[0].mxu0
  %v351 = vadd.f32 0.0, %v350
  %v352 = vpop.f32.mrb[0].mxu0
  %353 = vdwg.mxu0
  %v354 = vadd.f32 %v283, %v351
  %v355 = vtanh.pop %v354
  %v356 = vxor.u32 %v354, 2147483648
  %v357 = vmul.f32 %v356, 1.442695
  %v358 = vpow.pop %v357
  %v359 = vadd.f32 %v358, 1.0
  %v360 = vrcp.pop %v359
  %v361 = vmul.f32 1.0, %v360
  %v362 = vsel %vm187, %v355, %v361
  %363 = vrot.lane.b32.xlu0 %v362, 96
  %v364 = vpop.permute.xlu0 %363
  %365 = vrot.lane.b32.xlu0 %v362, 64
  %v366 = vpop.permute.xlu0 %365
  %367 = vrot.lane.b32.xlu0 %v362, 32
  %v368 = vpop.permute.xlu0 %367
  %v369 = vmul.f32 %v364, %v281
  %v370 = vmul.f32 %v362, %v366
  %v371 = vadd.f32 %v369, %v370
  %v372 = vtanh.pop %v371
  %v373 = vmul.f32 %v368, %v372
  %vm374 = vcmp.gt.s32.totalorder %v166, 1
  %v375 = vsel %vm374, %v373, %v280
  %v376 = vsel %vm374, %v371, %v281
  %v377 = vsel %vm374, %v373, 0.0
  %s378 = scalar_lea.vmem %s8, 8
  %379 = vst [vmem:[%s378] sm:$0xff] %v377
  %v380 = vld [vmem:[#allocation2 + $0x10] sm:$0xff]
  %381 = vmatprep.subr.mxu0 0.0
  %382 = vmatpush1.msra.mxu0 %v167
  %383 = vmatprep.subr.mxu0 0.0
  %384 = vmatpush1.msra.mxu0 %v168
  %385 = vmatprep.subr.mxu0 0.0
  %386 = vmatpush1.msra.mxu0 %v169
  %387 = vmatprep.subr.mxu0 0.0
  %388 = vmatpush1.msra.mxu0 %v170
  %389 = vmatprep.subr.mxu0 0.0
  %390 = vmatpush1.msra.mxu0 %v171
  %391 = vmatprep.subr.mxu0 0.0
  %392 = vmatpush1.msra.mxu0 %v172
  %393 = vmatprep.subr.mxu0 0.0
  %394 = vmatpush1.msra.mxu0 %v173
  %395 = vmatprep.subr.mxu0 0.0
  %396 = vmatpush1.msra.mxu0 %v174
  %397 = vmatprep.subr.mxu0 0.0
  %398 = vmatpush1.msra.mxu0 %v175
  %399 = vmatprep.subr.mxu0 0.0
  %400 = vmatpush1.msra.mxu0 %v176
  %401 = vmatprep.subr.mxu0 0.0
  %402 = vmatpush1.msra.mxu0 %v177
  %403 = vmatprep.subr.mxu0 0.0
  %404 = vmatpush1.msra.mxu0 %v178
  %405 = vmatprep.subr.mxu0 0.0
  %406 = vmatpush1.msra.mxu0 %v179
  %407 = vmatprep.subr.mxu0 0.0
  %408 = vmatpush1.msra.mxu0 %v180
  %409 = vmatprep.subr.mxu0 0.0
  %410 = vmatpush1.msra.mxu0 %v181
  %411 = vmatprep.subr.mxu0 0.0
  %412 = vmatpush1.msra.mxu0 %v182
  %413 = vmatprep.subr.mxu0 0.0
  %414 = vmatpush1.msra.mxu0 0.0
  %415 = vmatprep.subr.mxu0 0.0
  %416 = vmatpush1.msra.mxu0 0.0
  %417 = vmatprep.subr.mxu0 0.0
  %418 = vmatpush1.msra.mxu0 0.0
  %419 = vmatprep.subr.mxu0 0.0
  %420 = vmatpush1.msra.mxu0 0.0
  %421 = vmatprep.subr.mxu0 0.0
  %422 = vmatpush1.msra.mxu0 0.0
  %423 = vmatprep.subr.mxu0 0.0
  %424 = vmatpush1.msra.mxu0 0.0
  %425 = vmatprep.subr.mxu0 0.0
  %426 = vmatpush1.msra.mxu0 0.0
  %427 = vmatprep.subr.mxu0 0.0
  %428 = vmatpush1.msra.mxu0 0.0
  %429 = vmatprep.subr.mxu0 0.0
  %430 = vmatpush1.msra.mxu0 0.0
  %431 = vmatprep.subr.mxu0 0.0
  %432 = vmatpush1.msra.mxu0 0.0
  %433 = vmatprep.subr.mxu0 0.0
  %434 = vmatpush1.msra.mxu0 0.0
  %435 = vmatprep.subr.mxu0 0.0
  %436 = vmatpush1.msra.mxu0 0.0
  %437 = vmatprep.subr.mxu0 0.0
  %438 = vmatpush1.msra.mxu0 0.0
  %439 = vmatprep.subr.mxu0 0.0
  %440 = vmatpush1.msra.mxu0 0.0
  %441 = vmatprep.subr.mxu0 0.0
  %442 = vmatpush1.msra.mxu0 0.0
  %443 = vmatprep.subr.mxu0 0.0
  %444 = vmatpush1.msra.mxu0 0.0
  %445 = vmatprep.mubr.f32.mxu0 0.0
  %446 = vmatmul.mubr.f32.gmra.mrb[0].mxu0 %v375
  %v447 = vpop.f32.mrb[0].mxu0
  %v448 = vadd.f32 0.0, %v447
  %v449 = vpop.f32.mrb[0].mxu0
  %450 = vdwg.mxu0
  %v451 = vadd.f32 %v380, %v448
  %v452 = vtanh.pop %v451
  %v453 = vxor.u32 %v451, 2147483648
  %v454 = vmul.f32 %v453, 1.442695
  %v455 = vpow.pop %v454
  %v456 = vadd.f32 %v455, 1.0
  %v457 = vrcp.pop %v456
  %v458 = vmul.f32 1.0, %v457
  %v459 = vsel %vm187, %v452, %v458
  %460 = vrot.lane.b32.xlu0 %v459, 96
  %v461 = vpop.permute.xlu0 %460
  %462 = vrot.lane.b32.xlu0 %v459, 64
  %v463 = vpop.permute.xlu0 %462
  %464 = vrot.lane.b32.xlu0 %v459, 32
  %v465 = vpop.permute.xlu0 %464
  %v466 = vmul.f32 %v461, %v376
  %v467 = vmul.f32 %v459, %v463
  %v468 = vadd.f32 %v466, %v467
  %v469 = vtanh.pop %v468
  %v470 = vmul.f32 %v465, %v469
  %vm471 = vcmp.gt.s32.totalorder %v166, 2
  %v472 = vsel %vm471, %v470, %v375
  %v473 = vsel %vm471, %v468, %v376
  %v474 = vsel %vm471, %v470, 0.0
  %s475 = scalar_lea.vmem %s8, 16
  %476 = vst [vmem:[%s475] sm:$0xff] %v474
  %v477 = vld [vmem:[#allocation2 + $0x18] sm:$0xff]
  %478 = vmatprep.subr.mxu0 0.0
  %479 = vmatpush1.msra.mxu0 %v167
  %480 = vmatprep.subr.mxu0 0.0
  %481 = vmatpush1.msra.mxu0 %v168
  %482 = vmatprep.subr.mxu0 0.0
  %483 = vmatpush1.msra.mxu0 %v169
  %484 = vmatprep.subr.mxu0 0.0
  %485 = vmatpush1.msra.mxu0 %v170
  %486 = vmatprep.subr.mxu0 0.0
  %487 = vmatpush1.msra.mxu0 %v171
  %488 = vmatprep.subr.mxu0 0.0
  %489 = vmatpush1.msra.mxu0 %v172
  %490 = vmatprep.subr.mxu0 0.0
  %491 = vmatpush1.msra.mxu0 %v173
  %492 = vmatprep.subr.mxu0 0.0
  %493 = vmatpush1.msra.mxu0 %v174
  %494 = vmatprep.subr.mxu0 0.0
  %495 = vmatpush1.msra.mxu0 %v175
  %496 = vmatprep.subr.mxu0 0.0
  %497 = vmatpush1.msra.mxu0 %v176
  %498 = vmatprep.subr.mxu0 0.0
  %499 = vmatpush1.msra.mxu0 %v177
  %500 = vmatprep.subr.mxu0 0.0
  %501 = vmatpush1.msra.mxu0 %v178
  %502 = vmatprep.subr.mxu0 0.0
  %503 = vmatpush1.msra.mxu0 %v179
  %504 = vmatprep.subr.mxu0 0.0
  %505 = vmatpush1.msra.mxu0 %v180
  %506 = vmatprep.subr.mxu0 0.0
  %507 = vmatpush1.msra.mxu0 %v181
  %508 = vmatprep.subr.mxu0 0.0
  %509 = vmatpush1.msra.mxu0 %v182
  %510 = vmatprep.subr.mxu0 0.0
  %511 = vmatpush1.msra.mxu0 0.0
  %512 = vmatprep.subr.mxu0 0.0
  %513 = vmatpush1.msra.mxu0 0.0
  %514 = vmatprep.subr.mxu0 0.0
  %515 = vmatpush1.msra.mxu0 0.0
  %516 = vmatprep.subr.mxu0 0.0
  %517 = vmatpush1.msra.mxu0 0.0
  %518 = vmatprep.subr.mxu0 0.0
  %519 = vmatpush1.msra.mxu0 0.0
  %520 = vmatprep.subr.mxu0 0.0
  %521 = vmatpush1.msra.mxu0 0.0
  %522 = vmatprep.subr.mxu0 0.0
  %523 = vmatpush1.msra.mxu0 0.0
  %524 = vmatprep.subr.mxu0 0.0
  %525 = vmatpush1.msra.mxu0 0.0
  %526 = vmatprep.subr.mxu0 0.0
  %527 = vmatpush1.msra.mxu0 0.0
  %528 = vmatprep.subr.mxu0 0.0
  %529 = vmatpush1.msra.mxu0 0.0
  %530 = vmatprep.subr.mxu0 0.0
  %531 = vmatpush1.msra.mxu0 0.0
  %532 = vmatprep.subr.mxu0 0.0
  %533 = vmatpush1.msra.mxu0 0.0
  %534 = vmatprep.subr.mxu0 0.0
  %535 = vmatpush1.msra.mxu0 0.0
  %536 = vmatprep.subr.mxu0 0.0
  %537 = vmatpush1.msra.mxu0 0.0
  %538 = vmatprep.subr.mxu0 0.0
  %539 = vmatpush1.msra.mxu0 0.0
  %540 = vmatprep.subr.mxu0 0.0
  %541 = vmatpush1.msra.mxu0 0.0
  %542 = vmatprep.mubr.f32.mxu0 0.0
  %543 = vmatmul.mubr.f32.gmra.mrb[0].mxu0 %v472
  %v544 = vpop.f32.mrb[0].mxu0
  %v545 = vadd.f32 0.0, %v544
  %v546 = vpop.f32.mrb[0].mxu0
  %547 = vdwg.mxu0
  %v548 = vadd.f32 %v477, %v545
  %v549 = vtanh.pop %v548
  %v550 = vxor.u32 %v548, 2147483648
  %v551 = vmul.f32 %v550, 1.442695
  %v552 = vpow.pop %v551
  %v553 = vadd.f32 %v552, 1.0
  %v554 = vrcp.pop %v553
  %v555 = vmul.f32 1.0, %v554
  %v556 = vsel %vm187, %v549, %v555
  %557 = vrot.lane.b32.xlu0 %v556, 96
  %v558 = vpop.permute.xlu0 %557
  %559 = vrot.lane.b32.xlu0 %v556, 64
  %v560 = vpop.permute.xlu0 %559
  %561 = vrot.lane.b32.xlu0 %v556, 32
  %v562 = vpop.permute.xlu0 %561
  %v563 = vmul.f32 %v558, %v473
  %v564 = vmul.f32 %v556, %v560
  %v565 = vadd.f32 %v563, %v564
  %v566 = vtanh.pop %v565
  %v567 = vmul.f32 %v562, %v566
  %vm568 = vcmp.gt.s32.totalorder %v166, 3
  %v569 = vsel %vm568, %v567, %v472
  %v570 = vsel %vm568, %v565, %v473
  %v571 = vsel %vm568, %v567, 0.0
  %s572 = scalar_lea.vmem %s8, 24
  %573 = vst [vmem:[%s572] sm:$0xff] %v571
  %v574 = vld [vmem:[#allocation2 + $0x20] sm:$0xff]
  %575 = vmatprep.subr.mxu0 0.0
  %576 = vmatpush1.msra.mxu0 %v167
  %577 = vmatprep.subr.mxu0 0.0
  %578 = vmatpush1.msra.mxu0 %v168
  %579 = vmatprep.subr.mxu0 0.0
  %580 = vmatpush1.msra.mxu0 %v169
  %581 = vmatprep.subr.mxu0 0.0
  %582 = vmatpush1.msra.mxu0 %v170
  %583 = vmatprep.subr.mxu0 0.0
  %584 = vmatpush1.msra.mxu0 %v171
  %585 = vmatprep.subr.mxu0 0.0
  %586 = vmatpush1.msra.mxu0 %v172
  %587 = vmatprep.subr.mxu0 0.0
  %588 = vmatpush1.msra.mxu0 %v173
  %589 = vmatprep.subr.mxu0 0.0
  %590 = vmatpush1.msra.mxu0 %v174
  %591 = vmatprep.subr.mxu0 0.0
  %592 = vmatpush1.msra.mxu0 %v175
  %593 = vmatprep.subr.mxu0 0.0
  %594 = vmatpush1.msra.mxu0 %v176
  %595 = vmatprep.subr.mxu0 0.0
  %596 = vmatpush1.msra.mxu0 %v177
  %597 = vmatprep.subr.mxu0 0.0
  %598 = vmatpush1.msra.mxu0 %v178
  %599 = vmatprep.subr.mxu0 0.0
  %600 = vmatpush1.msra.mxu0 %v179
  %601 = vmatprep.subr.mxu0 0.0
  %602 = vmatpush1.msra.mxu0 %v180
  %603 = vmatprep.subr.mxu0 0.0
  %604 = vmatpush1.msra.mxu0 %v181
  %605 = vmatprep.subr.mxu0 0.0
  %606 = vmatpush1.msra.mxu0 %v182
  %607 = vmatprep.subr.mxu0 0.0
  %608 = vmatpush1.msra.mxu0 0.0
  %609 = vmatprep.subr.mxu0 0.0
  %610 = vmatpush1.msra.mxu0 0.0
  %611 = vmatprep.subr.mxu0 0.0
  %612 = vmatpush1.msra.mxu0 0.0
  %613 = vmatprep.subr.mxu0 0.0
  %614 = vmatpush1.msra.mxu0 0.0
  %615 = vmatprep.subr.mxu0 0.0
  %616 = vmatpush1.msra.mxu0 0.0
  %617 = vmatprep.subr.mxu0 0.0
  %618 = vmatpush1.msra.mxu0 0.0
  %619 = vmatprep.subr.mxu0 0.0
  %620 = vmatpush1.msra.mxu0 0.0
  %621 = vmatprep.subr.mxu0 0.0
  %622 = vmatpush1.msra.mxu0 0.0
  %623 = vmatprep.subr.mxu0 0.0
  %624 = vmatpush1.msra.mxu0 0.0
  %625 = vmatprep.subr.mxu0 0.0
  %626 = vmatpush1.msra.mxu0 0.0
  %627 = vmatprep.subr.mxu0 0.0
  %628 = vmatpush1.msra.mxu0 0.0
  %629 = vmatprep.subr.mxu0 0.0
  %630 = vmatpush1.msra.mxu0 0.0
  %631 = vmatprep.subr.mxu0 0.0
  %632 = vmatpush1.msra.mxu0 0.0
  %633 = vmatprep.subr.mxu0 0.0
  %634 = vmatpush1.msra.mxu0 0.0
  %635 = vmatprep.subr.mxu0 0.0
  %636 = vmatpush1.msra.mxu0 0.0
  %637 = vmatprep.subr.mxu0 0.0
  %638 = vmatpush1.msra.mxu0 0.0
  %639 = vmatprep.mubr.f32.mxu0 0.0
  %640 = vmatmul.mubr.f32.gmra.mrb[0].mxu0 %v569
  %v641 = vpop.f32.mrb[0].mxu0
  %v642 = vadd.f32 0.0, %v641
  %v643 = vpop.f32.mrb[0].mxu0
  %644 = vdwg.mxu0
  %v645 = vadd.f32 %v574, %v642
  %v646 = vtanh.pop %v645
  %v647 = vxor.u32 %v645, 2147483648
  %v648 = vmul.f32 %v647, 1.442695
  %v649 = vpow.pop %v648
  %v650 = vadd.f32 %v649, 1.0
  %v651 = vrcp.pop %v650
  %v652 = vmul.f32 1.0, %v651
  %v653 = vsel %vm187, %v646, %v652
  %654 = vrot.lane.b32.xlu0 %v653, 96
  %v655 = vpop.permute.xlu0 %654
  %656 = vrot.lane.b32.xlu0 %v653, 64
  %v657 = vpop.permute.xlu0 %656
  %658 = vrot.lane.b32.xlu0 %v653, 32
  %v659 = vpop.permute.xlu0 %658
  %v660 = vmul.f32 %v655, %v570
  %v661 = vmul.f32 %v653, %v657
  %v662 = vadd.f32 %v660, %v661
  %v663 = vtanh.pop %v662
  %v664 = vmul.f32 %v659, %v663
  %vm665 = vcmp.gt.s32.totalorder %v166, 4
  %v666 = vsel %vm665, %v664, %v569
  %v667 = vsel %vm665, %v662, %v570
  %v668 = vsel %vm665, %v664, 0.0
  %s669 = scalar_lea.vmem %s8, 32
  %670 = vst [vmem:[%s669] sm:$0xff] %v668
  %v671 = vld [vmem:[#allocation2 + $0x28] sm:$0xff]
  %672 = vmatprep.subr.mxu0 0.0
  %673 = vmatpush1.msra.mxu0 %v167
  %674 = vmatprep.subr.mxu0 0.0
  %675 = vmatpush1.msra.mxu0 %v168
  %676 = vmatprep.subr.mxu0 0.0
  %677 = vmatpush1.msra.mxu0 %v169
  %678 = vmatprep.subr.mxu0 0.0
  %679 = vmatpush1.msra.mxu0 %v170
  %680 = vmatprep.subr.mxu0 0.0
  %681 = vmatpush1.msra.mxu0 %v171
  %682 = vmatprep.subr.mxu0 0.0
  %683 = vmatpush1.msra.mxu0 %v172
  %684 = vmatprep.subr.mxu0 0.0
  %685 = vmatpush1.msra.mxu0 %v173
  %686 = vmatprep.subr.mxu0 0.0
  %687 = vmatpush1.msra.mxu0 %v174
  %688 = vmatprep.subr.mxu0 0.0
  %689 = vmatpush1.msra.mxu0 %v175
  %690 = vmatprep.subr.mxu0 0.0
  %691 = vmatpush1.msra.mxu0 %v176
  %692 = vmatprep.subr.mxu0 0.0
  %693 = vmatpush1.msra.mxu0 %v177
  %694 = vmatprep.subr.mxu0 0.0
  %695 = vmatpush1.msra.mxu0 %v178
  %696 = vmatprep.subr.mxu0 0.0
  %697 = vmatpush1.msra.mxu0 %v179
  %698 = vmatprep.subr.mxu0 0.0
  %699 = vmatpush1.msra.mxu0 %v180
  %700 = vmatprep.subr.mxu0 0.0
  %701 = vmatpush1.msra.mxu0 %v181
  %702 = vmatprep.subr.mxu0 0.0
  %703 = vmatpush1.msra.mxu0 %v182
  %704 = vmatprep.subr.mxu0 0.0
  %705 = vmatpush1.msra.mxu0 0.0
  %706 = vmatprep.subr.mxu0 0.0
  %707 = vmatpush1.msra.mxu0 0.0
  %708 = vmatprep.subr.mxu0 0.0
  %709 = vmatpush1.msra.mxu0 0.0
  %710 = vmatprep.subr.mxu0 0.0
  %711 = vmatpush1.msra.mxu0 0.0
  %712 = vmatprep.subr.mxu0 0.0
  %713 = vmatpush1.msra.mxu0 0.0
  %714 = vmatprep.subr.mxu0 0.0
  %715 = vmatpush1.msra.mxu0 0.0
  %716 = vmatprep.subr.mxu0 0.0
  %717 = vmatpush1.msra.mxu0 0.0
  %718 = vmatprep.subr.mxu0 0.0
  %719 = vmatpush1.msra.mxu0 0.0
  %720 = vmatprep.subr.mxu0 0.0
  %721 = vmatpush1.msra.mxu0 0.0
  %722 = vmatprep.subr.mxu0 0.0
  %723 = vmatpush1.msra.mxu0 0.0
  %724 = vmatprep.subr.mxu0 0.0
  %725 = vmatpush1.msra.mxu0 0.0
  %726 = vmatprep.subr.mxu0 0.0
  %727 = vmatpush1.msra.mxu0 0.0
  %728 = vmatprep.subr.mxu0 0.0
  %729 = vmatpush1.msra.mxu0 0.0
  %730 = vmatprep.subr.mxu0 0.0
  %731 = vmatpush1.msra.mxu0 0.0
  %732 = vmatprep.subr.mxu0 0.0
  %733 = vmatpush1.msra.mxu0 0.0
  %734 = vmatprep.subr.mxu0 0.0
  %735 = vmatpush1.msra.mxu0 0.0
  %736 = vmatprep.mubr.f32.mxu0 0.0
  %737 = vmatmul.mubr.f32.gmra.mrb[0].mxu0 %v666
  %v738 = vpop.f32.mrb[0].mxu0
  %v739 = vadd.f32 0.0, %v738
  %v740 = vpop.f32.mrb[0].mxu0
  %741 = vdwg.mxu0
  %v742 = vadd.f32 %v671, %v739
  %v743 = vtanh.pop %v742
  %v744 = vxor.u32 %v742, 2147483648
  %v745 = vmul.f32 %v744, 1.442695
  %v746 = vpow.pop %v745
  %v747 = vadd.f32 %v746, 1.0
  %v748 = vrcp.pop %v747
  %v749 = vmul.f32 1.0, %v748
  %v750 = vsel %vm187, %v743, %v749
  %751 = vrot.lane.b32.xlu0 %v750, 96
  %v752 = vpop.permute.xlu0 %751
  %753 = vrot.lane.b32.xlu0 %v750, 64
  %v754 = vpop.permute.xlu0 %753
  %755 = vrot.lane.b32.xlu0 %v750, 32
  %v756 = vpop.permute.xlu0 %755
  %v757 = vmul.f32 %v752, %v667
  %v758 = vmul.f32 %v750, %v754
  %v759 = vadd.f32 %v757, %v758
  %v760 = vtanh.pop %v759
  %v761 = vmul.f32 %v756, %v760
  %vm762 = vcmp.gt.s32.totalorder %v166, 5
  %v763 = vsel %vm762, %v761, %v666
  %v764 = vsel %vm762, %v759, %v667
  %v765 = vsel %vm762, %v761, 0.0
  %s766 = scalar_lea.vmem %s8, 40
  %767 = vst [vmem:[%s766] sm:$0xff] %v765
  %v768 = vld [vmem:[#allocation2 + $0x30] sm:$0xff]
  %769 = vmatprep.subr.mxu0 0.0
  %770 = vmatpush1.msra.mxu0 %v167
  %771 = vmatprep.subr.mxu0 0.0
  %772 = vmatpush1.msra.mxu0 %v168
  %773 = vmatprep.subr.mxu0 0.0
  %774 = vmatpush1.msra.mxu0 %v169
  %775 = vmatprep.subr.mxu0 0.0
  %776 = vmatpush1.msra.mxu0 %v170
  %777 = vmatprep.subr.mxu0 0.0
  %778 = vmatpush1.msra.mxu0 %v171
  %779 = vmatprep.subr.mxu0 0.0
  %780 = vmatpush1.msra.mxu0 %v172
  %781 = vmatprep.subr.mxu0 0.0
  %782 = vmatpush1.msra.mxu0 %v173
  %783 = vmatprep.subr.mxu0 0.0
  %784 = vmatpush1.msra.mxu0 %v174
  %785 = vmatprep.subr.mxu0 0.0
  %786 = vmatpush1.msra.mxu0 %v175
  %787 = vmatprep.subr.mxu0 0.0
  %788 = vmatpush1.msra.mxu0 %v176
  %789 = vmatprep.subr.mxu0 0.0
  %790 = vmatpush1.msra.mxu0 %v177
  %791 = vmatprep.subr.mxu0 0.0
  %792 = vmatpush1.msra.mxu0 %v178
  %793 = vmatprep.subr.mxu0 0.0
  %794 = vmatpush1.msra.mxu0 %v179
  %795 = vmatprep.subr.mxu0 0.0
  %796 = vmatpush1.msra.mxu0 %v180
  %797 = vmatprep.subr.mxu0 0.0
  %798 = vmatpush1.msra.mxu0 %v181
  %799 = vmatprep.subr.mxu0 0.0
  %800 = vmatpush1.msra.mxu0 %v182
  %801 = vmatprep.subr.mxu0 0.0
  %802 = vmatpush1.msra.mxu0 0.0
  %803 = vmatprep.subr.mxu0 0.0
  %804 = vmatpush1.msra.mxu0 0.0
  %805 = vmatprep.subr.mxu0 0.0
  %806 = vmatpush1.msra.mxu0 0.0
  %807 = vmatprep.subr.mxu0 0.0
  %808 = vmatpush1.msra.mxu0 0.0
  %809 = vmatprep.subr.mxu0 0.0
  %810 = vmatpush1.msra.mxu0 0.0
  %811 = vmatprep.subr.mxu0 0.0
  %812 = vmatpush1.msra.mxu0 0.0
  %813 = vmatprep.subr.mxu0 0.0
  %814 = vmatpush1.msra.mxu0 0.0
  %815 = vmatprep.subr.mxu0 0.0
  %816 = vmatpush1.msra.mxu0 0.0
  %817 = vmatprep.subr.mxu0 0.0
  %818 = vmatpush1.msra.mxu0 0.0
  %819 = vmatprep.subr.mxu0 0.0
  %820 = vmatpush1.msra.mxu0 0.0
  %821 = vmatprep.subr.mxu0 0.0
  %822 = vmatpush1.msra.mxu0 0.0
  %823 = vmatprep.subr.mxu0 0.0
  %824 = vmatpush1.msra.mxu0 0.0
  %825 = vmatprep.subr.mxu0 0.0
  %826 = vmatpush1.msra.mxu0 0.0
  %827 = vmatprep.subr.mxu0 0.0
  %828 = vmatpush1.msra.mxu0 0.0
  %829 = vmatprep.subr.mxu0 0.0
  %830 = vmatpush1.msra.mxu0 0.0
  %831 = vmatprep.subr.mxu0 0.0
  %832 = vmatpush1.msra.mxu0 0.0
  %833 = vmatprep.mubr.f32.mxu0 0.0
  %834 = vmatmul.mubr.f32.gmra.mrb[0].mxu0 %v763
  %v835 = vpop.f32.mrb[0].mxu0
  %v836 = vadd.f32 0.0, %v835
  %v837 = vpop.f32.mrb[0].mxu0
  %838 = vdwg.mxu0
  %v839 = vadd.f32 %v768, %v836
  %v840 = vtanh.pop %v839
  %v841 = vxor.u32 %v839, 2147483648
  %v842 = vmul.f32 %v841, 1.442695
  %v843 = vpow.pop %v842
  %v844 = vadd.f32 %v843, 1.0
  %v845 = vrcp.pop %v844
  %v846 = vmul.f32 1.0, %v845
  %v847 = vsel %vm187, %v840, %v846
  %848 = vrot.lane.b32.xlu0 %v847, 96
  %v849 = vpop.permute.xlu0 %848
  %850 = vrot.lane.b32.xlu0 %v847, 64
  %v851 = vpop.permute.xlu0 %850
  %852 = vrot.lane.b32.xlu0 %v847, 32
  %v853 = vpop.permute.xlu0 %852
  %v854 = vmul.f32 %v849, %v764
  %v855 = vmul.f32 %v847, %v851
  %v856 = vadd.f32 %v854, %v855
  %v857 = vtanh.pop %v856
  %v858 = vmul.f32 %v853, %v857
  %vm859 = vcmp.gt.s32.totalorder %v166, 6
  %v860 = vsel %vm859, %v858, %v763
  %v861 = vsel %vm859, %v856, %v764
  %v862 = vsel %vm859, %v858, 0.0
  %s863 = scalar_lea.vmem %s8, 48
  %864 = vst [vmem:[%s863] sm:$0xff] %v862
  %v865 = vld [vmem:[#allocation2 + $0x38] sm:$0xff]
  %866 = vmatprep.subr.mxu0 0.0
  %867 = vmatpush1.msra.mxu0 %v167
  %868 = vmatprep.subr.mxu0 0.0
  %869 = vmatpush1.msra.mxu0 %v168
  %870 = vmatprep.subr.mxu0 0.0
  %871 = vmatpush1.msra.mxu0 %v169
  %872 = vmatprep.subr.mxu0 0.0
  %873 = vmatpush1.msra.mxu0 %v170
  %874 = vmatprep.subr.mxu0 0.0
  %875 = vmatpush1.msra.mxu0 %v171
  %876 = vmatprep.subr.mxu0 0.0
  %877 = vmatpush1.msra.mxu0 %v172
  %878 = vmatprep.subr.mxu0 0.0
  %879 = vmatpush1.msra.mxu0 %v173
  %880 = vmatprep.subr.mxu0 0.0
  %881 = vmatpush1.msra.mxu0 %v174
  %882 = vmatprep.subr.mxu0 0.0
  %883 = vmatpush1.msra.mxu0 %v175
  %884 = vmatprep.subr.mxu0 0.0
  %885 = vmatpush1.msra.mxu0 %v176
  %886 = vmatprep.subr.mxu0 0.0
  %887 = vmatpush1.msra.mxu0 %v177
  %888 = vmatprep.subr.mxu0 0.0
  %889 = vmatpush1.msra.mxu0 %v178
  %890 = vmatprep.subr.mxu0 0.0
  %891 = vmatpush1.msra.mxu0 %v179
  %892 = vmatprep.subr.mxu0 0.0
  %893 = vmatpush1.msra.mxu0 %v180
  %894 = vmatprep.subr.mxu0 0.0
  %895 = vmatpush1.msra.mxu0 %v181
  %896 = vmatprep.subr.mxu0 0.0
  %897 = vmatpush1.msra.mxu0 %v182
  %898 = vmatprep.subr.mxu0 0.0
  %899 = vmatpush1.msra.mxu0 0.0
  %900 = vmatprep.subr.mxu0 0.0
  %901 = vmatpush1.msra.mxu0 0.0
  %902 = vmatprep.subr.mxu0 0.0
  %903 = vmatpush1.msra.mxu0 0.0
  %904 = vmatprep.subr.mxu0 0.0
  %905 = vmatpush1.msra.mxu0 0.0
  %906 = vmatprep.subr.mxu0 0.0
  %907 = vmatpush1.msra.mxu0 0.0
  %908 = vmatprep.subr.mxu0 0.0
  %909 = vmatpush1.msra.mxu0 0.0
  %910 = vmatprep.subr.mxu0 0.0
  %911 = vmatpush1.msra.mxu0 0.0
  %912 = vmatprep.subr.mxu0 0.0
  %913 = vmatpush1.msra.mxu0 0.0
  %914 = vmatprep.subr.mxu0 0.0
  %915 = vmatpush1.msra.mxu0 0.0
  %916 = vmatprep.subr.mxu0 0.0
  %917 = vmatpush1.msra.mxu0 0.0
  %918 = vmatprep.subr.mxu0 0.0
  %919 = vmatpush1.msra.mxu0 0.0
  %920 = vmatprep.subr.mxu0 0.0
  %921 = vmatpush1.msra.mxu0 0.0
  %922 = vmatprep.subr.mxu0 0.0
  %923 = vmatpush1.msra.mxu0 0.0
  %924 = vmatprep.subr.mxu0 0.0
  %925 = vmatpush1.msra.mxu0 0.0
  %926 = vmatprep.subr.mxu0 0.0
  %927 = vmatpush1.msra.mxu0 0.0
  %928 = vmatprep.subr.mxu0 0.0
  %929 = vmatpush1.msra.mxu0 0.0
  %930 = vmatprep.mubr.f32.mxu0 0.0
  %931 = vmatmul.mubr.f32.gmra.mrb[0].mxu0 %v860
  %v932 = vpop.f32.mrb[0].mxu0
  %v933 = vadd.f32 0.0, %v932
  %v934 = vpop.f32.mrb[0].mxu0
  %935 = vdwg.mxu0
  %v936 = vadd.f32 %v865, %v933
  %v937 = vtanh.pop %v936
  %v938 = vxor.u32 %v936, 2147483648
  %v939 = vmul.f32 %v938, 1.442695
  %v940 = vpow.pop %v939
  %v941 = vadd.f32 %v940, 1.0
  %v942 = vrcp.pop %v941
  %v943 = vmul.f32 1.0, %v942
  %v944 = vsel %vm187, %v937, %v943
  %945 = vrot.lane.b32.xlu0 %v944, 96
  %v946 = vpop.permute.xlu0 %945
  %947 = vrot.lane.b32.xlu0 %v944, 64
  %v948 = vpop.permute.xlu0 %947
  %949 = vrot.lane.b32.xlu0 %v944, 32
  %v950 = vpop.permute.xlu0 %949
  %v951 = vmul.f32 %v946, %v861
  %v952 = vmul.f32 %v944, %v948
  %v953 = vadd.f32 %v951, %v952
  %v954 = vtanh.pop %v953
  %v955 = vmul.f32 %v950, %v954
  %vm956 = vcmp.gt.s32.totalorder %v166, 7
  %v957 = vsel %vm956, %v955, %v860
  %v958 = vsel %vm956, %v955, 0.0
  %s959 = scalar_lea.vmem %s8, 56
  %960 = vst [vmem:[%s959] sm:$0xff] %v958
  %v961 = vld [vmem:[%s5] sm:$0xff]
  %v962 = vld [vmem:[%s5 + $0x8] sm:$0xff]
  %v963 = vld [vmem:[%s5 + $0x10] sm:$0xff]
  %v964 = vld [vmem:[%s5 + $0x18] sm:$0xff]
  %v965 = vld [vmem:[%s5 + $0x20] sm:$0xff]
  %v966 = vld [vmem:[%s5 + $0x28] sm:$0xff]
  %v967 = vld [vmem:[%s5 + $0x30] sm:$0xff]
  %v968 = vld [vmem:[%s5 + $0x38] sm:$0xff]
  %v969 = vld [vmem:[%s5 + $0x40] sm:$0xff]
  %v970 = vld [vmem:[%s5 + $0x48] sm:$0xff]
  %v971 = vld [vmem:[%s5 + $0x50] sm:$0xff]
  %v972 = vld [vmem:[%s5 + $0x58] sm:$0xff]
  %v973 = vld [vmem:[%s5 + $0x60] sm:$0xff]
  %v974 = vld [vmem:[%s5 + $0x68] sm:$0xff]
  %v975 = vld [vmem:[%s5 + $0x70] sm:$0xff]
  %v976 = vld [vmem:[%s5 + $0x78] sm:$0xff]
  %v977 = vld [vmem:[%s6] sm:$0x1]
  %v979 = vlaneseq
  %v980 = vshrl.u32 %v979, 7
  %v981 = vsub.s32 0, %v980
  %v982 = vrot.slane %v977, %v981
  %984 = vmatprep.subr.mxu0 0.0
  %985 = vmatpush1.msra.mxu0 %v961
  %986 = vmatprep.subr.mxu0 0.0
  %987 = vmatpush1.msra.mxu0 %v962
  %988 = vmatprep.subr.mxu0 0.0
  %989 = vmatpush1.msra.mxu0 %v963
  %990 = vmatprep.subr.mxu0 0.0
  %991 = vmatpush1.msra.mxu0 %v964
  %992 = vmatprep.subr.mxu0 0.0
  %993 = vmatpush1.msra.mxu0 %v965
  %994 = vmatprep.subr.mxu0 0.0
  %995 = vmatpush1.msra.mxu0 %v966
  %996 = vmatprep.subr.mxu0 0.0
  %997 = vmatpush1.msra.mxu0 %v967
  %998 = vmatprep.subr.mxu0 0.0
  %999 = vmatpush1.msra.mxu0 %v968
  %1000 = vmatprep.subr.mxu0 0.0
  %1001 = vmatpush1.msra.mxu0 %v969
  %1002 = vmatprep.subr.mxu0 0.0
  %1003 = vmatpush1.msra.mxu0 %v970
  %1004 = vmatprep.subr.mxu0 0.0
  %1005 = vmatpush1.msra.mxu0 %v971
  %1006 = vmatprep.subr.mxu0 0.0
  %1007 = vmatpush1.msra.mxu0 %v972
  %1008 = vmatprep.subr.mxu0 0.0
  %1009 = vmatpush1.msra.mxu0 %v973
  %1010 = vmatprep.subr.mxu0 0.0
  %1011 = vmatpush1.msra.mxu0 %v974
  %1012 = vmatprep.subr.mxu0 0.0
  %1013 = vmatpush1.msra.mxu0 %v975
  %1014 = vmatprep.subr.mxu0 0.0
  %1015 = vmatpush1.msra.mxu0 %v976
  %1016 = vmatprep.subr.mxu0 0.0
  %1017 = vmatpush1.msra.mxu0 0.0
  %1018 = vmatprep.subr.mxu0 0.0
  %1019 = vmatpush1.msra.mxu0 0.0
  %1020 = vmatprep.subr.mxu0 0.0
  %1021 = vmatpush1.msra.mxu0 0.0
  %1022 = vmatprep.subr.mxu0 0.0
  %1023 = vmatpush1.msra.mxu0 0.0
  %1024 = vmatprep.subr.mxu0 0.0
  %1025 = vmatpush1.msra.mxu0 0.0
  %1026 = vmatprep.subr.mxu0 0.0
  %1027 = vmatpush1.msra.mxu0 0.0
  %1028 = vmatprep.subr.mxu0 0.0
  %1029 = vmatpush1.msra.mxu0 0.0
  %1030 = vmatprep.subr.mxu0 0.0
  %1031 = vmatpush1.msra.mxu0 0.0
  %1032 = vmatprep.subr.mxu0 0.0
  %1033 = vmatpush1.msra.mxu0 0.0
  %1034 = vmatprep.subr.mxu0 0.0
  %1035 = vmatpush1.msra.mxu0 0.0
  %1036 = vmatprep.subr.mxu0 0.0
  %1037 = vmatpush1.msra.mxu0 0.0
  %1038 = vmatprep.subr.mxu0 0.0
  %1039 = vmatpush1.msra.mxu0 0.0
  %1040 = vmatprep.subr.mxu0 0.0
  %1041 = vmatpush1.msra.mxu0 0.0
  %1042 = vmatprep.subr.mxu0 0.0
  %1043 = vmatpush1.msra.mxu0 0.0
  %1044 = vmatprep.subr.mxu0 0.0
  %1045 = vmatpush1.msra.mxu0 0.0
  %1046 = vmatprep.subr.mxu0 0.0
  %1047 = vmatpush1.msra.mxu0 0.0
  %1048 = vmatprep.mubr.f32.mxu0 0.0
  %1049 = vmatmul.mubr.f32.gmra.mrb[0].mxu0 %v957
  %v1050 = vpop.f32.mrb[0].mxu0
  %v1051 = vadd.f32 %v982, %v1050
  %v1052 = vpop.f32.mrb[0].mxu0
  %1053 = vdwg.mxu0
  %vm1054 = vcmask 31744
  %1055 = vst.msk [vmem:[%s7] sm:$0xff] %vm1054, %v1051
  // Predicated region
  $region30: #{rnn_forward.1} parent=0 // pred_check
    _
  $region31: #{rnn_forward.1} parent=0 // pred_check_branch
    %1057 = sbr.rel (0) target = $region33
  $region32: #{rnn_forward.1} parent=0 // pred_region
    _
  $region33: #{rnn_forward.1} parent=0 // pred_fallthru
    _
  // Predicated region
  $region34: #{rnn_forward.1} parent=0 // pred_check
    _
  $region35: #{rnn_forward.1} parent=0 // pred_check_branch
    %1059 = sbr.rel (0) target = $region37
  $region36: #{rnn_forward.1} parent=0 // pred_region
    _
  $region37: #{rnn_forward.1} parent=0 // pred_fallthru
    _
  // Predicated region
  $region38: #{rnn_forward.1} parent=0 // pred_check
    _
  $region39: #{rnn_forward.1} parent=0 // pred_check_branch
    %1061 = sbr.rel (0) target = $region41
  $region40: #{rnn_forward.1} parent=0 // pred_region
    _
  $region41: #{rnn_forward.1} parent=0 // pred_fallthru
    _
  // Predicated region
  $region42: #{rnn_forward.1} parent=0 // pred_check
    _
  $region43: #{rnn_forward.1} parent=0 // pred_check_branch
    %1063 = sbr.rel (0) target = $region45
  $region44: #{rnn_forward.1} parent=0 // pred_region
    _
  $region45: #{rnn_forward.1} parent=0 // pred_fallthru
    _

</llo_original>
